<compile_context>
chip_gen: v7x
topology: tpu7x:2x2x1
jax: 0.10.0
libtpu: 0.0.40
codegen_flags: <defaults>
</compile_context>

<pallas_src>
import functools

import jax
import jax.numpy as jnp
from jax.experimental import pallas as pl
from jax.experimental.pallas import tpu as pltpu  # noqa: F401  (TPU backend)


# ----------------------------------------------------------------------------
# Fused Pallas kernel: encoder (4 hetero SAGE layers) + EdgeDecoder MLP
# ----------------------------------------------------------------------------
def _fused_model_kernel(idx_ref, x_ref, a_ref, *refs, num_rel, num_layers):
    out_ref = refs[-1]
    conv_refs = refs[:3 * num_layers]
    (w1t_ref, w1b_ref, b1_ref, w2_ref, b2_ref, w3_ref, b3_ref,
     w4t_ref, b4_ref) = refs[3 * num_layers:-1]

    n = x_ref.shape[0]
    a_rows = a_ref[...]          # (R*N, N), read once, reused by all layers
    z = x_ref[...]               # evolving node embeddings, stays in VMEM/vregs

    # ---- encoder: to_hetero(SAGEConv, aggr='sum'), relu on layers 1..3 ----
    for l in range(num_layers):
        wl_ref = conv_refs[3 * l]              # (R, F_l, H)
        wr_sum = conv_refs[3 * l + 1][...]     # (F_l, H)
        b_sum = conv_refs[3 * l + 2][...]      # (1, H)
        # relation-invariant root term initializes the accumulator directly.
        acc = jnp.dot(z, wr_sum, preferred_element_type=jnp.float32) + b_sum
        # all R neighbor-mean aggregations in a single MXU push.
        agg_all = jnp.dot(a_rows, z, preferred_element_type=jnp.float32)  # (R*N, F_l)
        for r in range(num_rel):               # static unroll, num_rel is tiny
            acc = acc + jnp.dot(agg_all[r * n:(r + 1) * n, :], wl_ref[r],
                                preferred_element_type=jnp.float32)
        if l < num_layers - 1:
            acc = jnp.maximum(acc, 0.0)
        z = acc

    # ---- decoder: gather + concat + lin1 fused into one one-hot matmul ----
    row = idx_ref[:, 0:1]                      # (E, 1) int32
    col = idx_ref[:, 1:2]                      # (E, 1) int32
    e = row.shape[0]
    # one-hot over a doubled node axis: lane j<N selects the row endpoint,
    # lane j>=N selects the col endpoint (row < N and col+N >= N never clash).
    lane = jax.lax.broadcasted_iota(jnp.int32, (e, 2 * n), 1)
    onehot = ((lane == row) | (lane == (col + n))).astype(jnp.float32)   # (E, 2N)
    # pre-project z through the two halves of lin1; stacking them row-wise makes
    # z[row] @ W1[:H] + z[col] @ W1[H:] a single (E,2N) x (2N,H) MXU push.
    zw = jnp.concatenate(
        [jnp.dot(z, w1t_ref[...], preferred_element_type=jnp.float32),
         jnp.dot(z, w1b_ref[...], preferred_element_type=jnp.float32)],
        axis=0)                                                          # (2N, H)
    h = jnp.dot(onehot, zw, preferred_element_type=jnp.float32) + b1_ref[...]
    h = jnp.maximum(h, 0.0)
    h = jnp.maximum(
        jnp.dot(h, w2_ref[...], preferred_element_type=jnp.float32) + b2_ref[...],
        0.0)
    h = jnp.maximum(
        jnp.dot(h, w3_ref[...], preferred_element_type=jnp.float32) + b3_ref[...],
        0.0)
    # lane-dense (1, E) logits: (1, H) x (E, H)^T on the MXU.
    out = jax.lax.dot_general(w4t_ref[...], h, (((1,), (1,)), ((), ())),
                              preferred_element_type=jnp.float32) + b4_ref[...]
    out_ref[...] = out


# ----------------------------------------------------------------------------
# Model glue (parameter init, adjacency construction, fused forward)
# ----------------------------------------------------------------------------
def _init_linear(key, fan_in, fan_out):
    """Deterministic init, PyTorch-Linear-like uniform bounds."""
    kw, kb = jax.random.split(key)
    bound = 1.0 / jnp.sqrt(jnp.float32(fan_in))
    w = jax.random.uniform(kw, (fan_in, fan_out), jnp.float32, -bound, bound)
    b = jax.random.uniform(kb, (1, fan_out), jnp.float32, -bound, bound)
    return w, b


def init_params(key, in_channels, hidden_channels, num_rel):
    keys = jax.random.split(key, 4 * num_rel * 2 + 4)
    ki = iter(range(len(keys)))
    convs = []
    layer_in = in_channels
    for _ in range(4):  # conv1..conv4 (all out = hidden_channels)
        wls, wrs, bls = [], [], []
        for _ in range(num_rel):
            wl, bl = _init_linear(keys[next(ki)], layer_in, hidden_channels)
            wr, _ = _init_linear(keys[next(ki)], layer_in, hidden_channels)
            wls.append(wl)
            wrs.append(wr)
            bls.append(bl)
        convs.append((jnp.stack(wls), jnp.stack(wrs), jnp.stack(bls)))
        layer_in = hidden_channels
    dec = [
        _init_linear(keys[next(ki)], 2 * hidden_channels, hidden_channels),
        _init_linear(keys[next(ki)], hidden_channels, hidden_channels),
        _init_linear(keys[next(ki)], hidden_channels, hidden_channels),
        _init_linear(keys[next(ki)], hidden_channels, 1),
    ]
    return {"convs": convs, "dec": dec}


def build_norm_adj(edge_index, num_nodes):
    """Row-normalized dense adjacency: A[i, j] = (#edges j->i) / deg_in(i)."""
    src, dst = edge_index
    a = jnp.zeros((num_nodes, num_nodes), jnp.float32)
    a = a.at[dst, src].add(1.0)
    deg = a.sum(axis=1, keepdims=True)
    return a / jnp.maximum(deg, 1.0)


def model_forward(params, x_author, a_norm_stack, edge_label_index):
    num_rel, n, _ = a_norm_stack.shape
    h = params["convs"][0][0].shape[-1]
    num_layers = len(params["convs"])

    # Row-stack the R adjacencies so the kernel does one A matmul per layer.
    a_rows = a_norm_stack.reshape(num_rel * n, n)
    # Edge indices as (E, 2) so the kernel can compare against a 2-D iota.
    idx = edge_label_index.T.astype(jnp.int32)
    e_label = idx.shape[0]

    conv_args = []
    flops = 0
    f = x_author.shape[1]
    for (wl, wr, bl) in params["convs"]:
        # Pre-sum the relation-invariant root weights / biases (aggr='sum').
        conv_args += [wl, wr.sum(axis=0), bl.sum(axis=0)]
        flops += 2 * (num_rel * n) * n * f          # A_rows @ z
        flops += 2 * n * f * h                      # z @ Wr_sum
        flops += 2 * num_rel * n * f * h            # agg_r @ Wl_r
        f = h

    (w1, b1), (w2, b2), (w3, b3), (w4, b4) = params["dec"]
    dec_args = [w1[:h], w1[h:], b1, w2, b2, w3, b3, w4.T, b4]
    flops += 2 * 2 * n * h * h                      # z @ W1 halves (pre-projection)
    flops += 2 * e_label * (2 * n) * h              # fused gather+lin1 one-hot matmul
    flops += 2 * e_label * h * (2 * h + 1)          # lin2, lin3, lin4

    args = [idx, x_author, a_rows] + conv_args + dec_args
    bytes_accessed = (sum(int(v.size) * v.dtype.itemsize for v in args)
                      + 4 * e_label)

    out = pl.pallas_call(
        functools.partial(_fused_model_kernel, num_rel=num_rel,
                          num_layers=num_layers),
        out_shape=jax.ShapeDtypeStruct((1, e_label), jnp.float32),
        cost_estimate=pl.CostEstimate(flops=flops, transcendentals=0,
                                      bytes_accessed=bytes_accessed),
    )(*args)
    return out.reshape(-1)


# ----------------------------------------------------------------------------
if __name__ == "__main__":
    key = jax.random.PRNGKey(0)

    N = 32           # number of author nodes
    F_IN = 16        # input feature dim
    HIDDEN = 32      # hidden_channels
    E = 64           # edges per author->author relation
    NUM_REL = 2      # author->author edge types (to_hetero sums over them)
    E_LABEL = 8      # supervision edges for the decoder

    k_x, k_e1, k_e2, k_lbl, k_par = jax.random.split(key, 5)

    x_author = jax.random.normal(k_x, (N, F_IN), jnp.float32)
    edge_index_r1 = jax.random.randint(k_e1, (2, E), 0, N, jnp.int32)
    edge_index_r2 = jax.random.randint(k_e2, (2, E), 0, N, jnp.int32)
    edge_label_index = jax.random.randint(k_lbl, (2, E_LABEL), 0, N, jnp.int32)

    a_norm_stack = jnp.stack(
        [build_norm_adj(edge_index_r1, N), build_norm_adj(edge_index_r2, N)]
    )

    params = init_params(k_par, F_IN, HIDDEN, NUM_REL)

    fwd = jax.jit(model_forward)
    out = fwd(params, x_author, a_norm_stack, edge_label_index)
    out = jax.block_until_ready(out)

    assert out.shape == (E_LABEL,), out.shape
    assert out.dtype == jnp.float32
    print("KERNEL_OK")
</pallas_src>

<mosaic_0001>
module attributes {stable_mosaic.version = 11 : i64} {
  func.func @_fused_model_kernel(%arg0: memref<8x2xi32, #tpu.memory_space<vmem>>, %arg1: memref<32x16xf32, #tpu.memory_space<vmem>>, %arg2: memref<64x32xf32, #tpu.memory_space<vmem>>, %arg3: memref<2x16x32xf32, #tpu.memory_space<vmem>>, %arg4: memref<16x32xf32, #tpu.memory_space<vmem>>, %arg5: memref<1x32xf32, #tpu.memory_space<vmem>>, %arg6: memref<2x32x32xf32, #tpu.memory_space<vmem>>, %arg7: memref<32x32xf32, #tpu.memory_space<vmem>>, %arg8: memref<1x32xf32, #tpu.memory_space<vmem>>, %arg9: memref<2x32x32xf32, #tpu.memory_space<vmem>>, %arg10: memref<32x32xf32, #tpu.memory_space<vmem>>, %arg11: memref<1x32xf32, #tpu.memory_space<vmem>>, %arg12: memref<2x32x32xf32, #tpu.memory_space<vmem>>, %arg13: memref<32x32xf32, #tpu.memory_space<vmem>>, %arg14: memref<1x32xf32, #tpu.memory_space<vmem>>, %arg15: memref<32x32xf32, #tpu.memory_space<vmem>>, %arg16: memref<32x32xf32, #tpu.memory_space<vmem>>, %arg17: memref<1x32xf32, #tpu.memory_space<vmem>>, %arg18: memref<32x32xf32, #tpu.memory_space<vmem>>, %arg19: memref<1x32xf32, #tpu.memory_space<vmem>>, %arg20: memref<32x32xf32, #tpu.memory_space<vmem>>, %arg21: memref<1x32xf32, #tpu.memory_space<vmem>>, %arg22: memref<1x32xf32, #tpu.memory_space<vmem>>, %arg23: memref<1x1xf32, #tpu.memory_space<vmem>>, %arg24: memref<1x8xf32, #tpu.memory_space<vmem>>) attributes {dimension_semantics = [], scalar_prefetch = 0 : i64, scratch_operands = 0 : i64, tpu.core_type = #tpu.core_type<tc>} {
    %c0 = arith.constant 0 : index
    %c0_0 = arith.constant 0 : index
    %0 = vector.load %arg2[%c0, %c0_0] : memref<64x32xf32, #tpu.memory_space<vmem>>, vector<64x32xf32>
    %c0_1 = arith.constant 0 : index
    %c0_2 = arith.constant 0 : index
    %1 = vector.load %arg1[%c0_1, %c0_2] : memref<32x16xf32, #tpu.memory_space<vmem>>, vector<32x16xf32>
    %c0_3 = arith.constant 0 : index
    %c0_4 = arith.constant 0 : index
    %2 = vector.load %arg4[%c0_3, %c0_4] : memref<16x32xf32, #tpu.memory_space<vmem>>, vector<16x32xf32>
    %c0_5 = arith.constant 0 : index
    %c0_6 = arith.constant 0 : index
    %3 = vector.load %arg5[%c0_5, %c0_6] : memref<1x32xf32, #tpu.memory_space<vmem>>, vector<1x32xf32>
    %cst = arith.constant dense<0.000000e+00> : vector<32x32xf32>
    %4 = tpu.matmul %1, %2, %cst {dimension_numbers = #tpu.dot_dimension_numbers<[1], [0], [0], [1], [0, 0, 1, 1], [], []>} : vector<32x16xf32>, vector<16x32xf32>, vector<32x32xf32> -> vector<32x32xf32>
    %5 = vector.broadcast %3 : vector<1x32xf32> to vector<32x32xf32>
    %6 = arith.addf %4, %5 : vector<32x32xf32>
    %cst_7 = arith.constant dense<0.000000e+00> : vector<64x16xf32>
    %7 = tpu.matmul %0, %1, %cst_7 {dimension_numbers = #tpu.dot_dimension_numbers<[1], [0], [0], [1], [0, 0, 1, 1], [], []>} : vector<64x32xf32>, vector<32x16xf32>, vector<64x16xf32> -> vector<64x16xf32>
    %8 = vector.extract_strided_slice %7 {offsets = [0, 0], sizes = [32, 16], strides = [1, 1]} : vector<64x16xf32> to vector<32x16xf32>
    %c0_8 = arith.constant 0 : index
    %c0_9 = arith.constant 0 : index
    %c0_10 = arith.constant 0 : index
    %9 = vector.load %arg3[%c0_8, %c0_9, %c0_10] : memref<2x16x32xf32, #tpu.memory_space<vmem>>, vector<1x16x32xf32>
    %10 = vector.shape_cast %9 : vector<1x16x32xf32> to vector<16x32xf32>
    %cst_11 = arith.constant dense<0.000000e+00> : vector<32x32xf32>
    %11 = tpu.matmul %8, %10, %cst_11 {dimension_numbers = #tpu.dot_dimension_numbers<[1], [0], [0], [1], [0, 0, 1, 1], [], []>} : vector<32x16xf32>, vector<16x32xf32>, vector<32x32xf32> -> vector<32x32xf32>
    %12 = arith.addf %6, %11 : vector<32x32xf32>
    %13 = vector.extract_strided_slice %7 {offsets = [32, 0], sizes = [32, 16], strides = [1, 1]} : vector<64x16xf32> to vector<32x16xf32>
    %c1 = arith.constant 1 : index
    %c0_12 = arith.constant 0 : index
    %c0_13 = arith.constant 0 : index
    %14 = vector.load %arg3[%c1, %c0_12, %c0_13] : memref<2x16x32xf32, #tpu.memory_space<vmem>>, vector<1x16x32xf32>
    %15 = vector.shape_cast %14 : vector<1x16x32xf32> to vector<16x32xf32>
    %cst_14 = arith.constant dense<0.000000e+00> : vector<32x32xf32>
    %16 = tpu.matmul %13, %15, %cst_14 {dimension_numbers = #tpu.dot_dimension_numbers<[1], [0], [0], [1], [0, 0, 1, 1], [], []>} : vector<32x16xf32>, vector<16x32xf32>, vector<32x32xf32> -> vector<32x32xf32>
    %17 = arith.addf %12, %16 : vector<32x32xf32>
    %cst_15 = arith.constant 0.000000e+00 : f32
    %18 = vector.broadcast %cst_15 : f32 to vector<32x32xf32>
    %19 = arith.maximumf %17, %18 : vector<32x32xf32>
    %c0_16 = arith.constant 0 : index
    %c0_17 = arith.constant 0 : index
    %20 = vector.load %arg7[%c0_16, %c0_17] : memref<32x32xf32, #tpu.memory_space<vmem>>, vector<32x32xf32>
    %c0_18 = arith.constant 0 : index
    %c0_19 = arith.constant 0 : index
    %21 = vector.load %arg8[%c0_18, %c0_19] : memref<1x32xf32, #tpu.memory_space<vmem>>, vector<1x32xf32>
    %cst_20 = arith.constant dense<0.000000e+00> : vector<32x32xf32>
    %22 = tpu.matmul %19, %20, %cst_20 {dimension_numbers = #tpu.dot_dimension_numbers<[1], [0], [0], [1], [0, 0, 1, 1], [], []>} : vector<32x32xf32>, vector<32x32xf32>, vector<32x32xf32> -> vector<32x32xf32>
    %23 = vector.broadcast %21 : vector<1x32xf32> to vector<32x32xf32>
    %24 = arith.addf %22, %23 : vector<32x32xf32>
    %cst_21 = arith.constant dense<0.000000e+00> : vector<64x32xf32>
    %25 = tpu.matmul %0, %19, %cst_21 {dimension_numbers = #tpu.dot_dimension_numbers<[1], [0], [0], [1], [0, 0, 1, 1], [], []>} : vector<64x32xf32>, vector<32x32xf32>, vector<64x32xf32> -> vector<64x32xf32>
    %26 = vector.extract_strided_slice %25 {offsets = [0, 0], sizes = [32, 32], strides = [1, 1]} : vector<64x32xf32> to vector<32x32xf32>
    %c0_22 = arith.constant 0 : index
    %c0_23 = arith.constant 0 : index
    %c0_24 = arith.constant 0 : index
    %27 = vector.load %arg6[%c0_22, %c0_23, %c0_24] : memref<2x32x32xf32, #tpu.memory_space<vmem>>, vector<1x32x32xf32>
    %28 = vector.shape_cast %27 : vector<1x32x32xf32> to vector<32x32xf32>
    %cst_25 = arith.constant dense<0.000000e+00> : vector<32x32xf32>
    %29 = tpu.matmul %26, %28, %cst_25 {dimension_numbers = #tpu.dot_dimension_numbers<[1], [0], [0], [1], [0, 0, 1, 1], [], []>} : vector<32x32xf32>, vector<32x32xf32>, vector<32x32xf32> -> vector<32x32xf32>
    %30 = arith.addf %24, %29 : vector<32x32xf32>
    %31 = vector.extract_strided_slice %25 {offsets = [32, 0], sizes = [32, 32], strides = [1, 1]} : vector<64x32xf32> to vector<32x32xf32>
    %c1_26 = arith.constant 1 : index
    %c0_27 = arith.constant 0 : index
    %c0_28 = arith.constant 0 : index
    %32 = vector.load %arg6[%c1_26, %c0_27, %c0_28] : memref<2x32x32xf32, #tpu.memory_space<vmem>>, vector<1x32x32xf32>
    %33 = vector.shape_cast %32 : vector<1x32x32xf32> to vector<32x32xf32>
    %cst_29 = arith.constant dense<0.000000e+00> : vector<32x32xf32>
    %34 = tpu.matmul %31, %33, %cst_29 {dimension_numbers = #tpu.dot_dimension_numbers<[1], [0], [0], [1], [0, 0, 1, 1], [], []>} : vector<32x32xf32>, vector<32x32xf32>, vector<32x32xf32> -> vector<32x32xf32>
    %35 = arith.addf %30, %34 : vector<32x32xf32>
    %cst_30 = arith.constant 0.000000e+00 : f32
    %36 = vector.broadcast %cst_30 : f32 to vector<32x32xf32>
    %37 = arith.maximumf %35, %36 : vector<32x32xf32>
    %c0_31 = arith.constant 0 : index
    %c0_32 = arith.constant 0 : index
    %38 = vector.load %arg10[%c0_31, %c0_32] : memref<32x32xf32, #tpu.memory_space<vmem>>, vector<32x32xf32>
    %c0_33 = arith.constant 0 : index
    %c0_34 = arith.constant 0 : index
    %39 = vector.load %arg11[%c0_33, %c0_34] : memref<1x32xf32, #tpu.memory_space<vmem>>, vector<1x32xf32>
    %cst_35 = arith.constant dense<0.000000e+00> : vector<32x32xf32>
    %40 = tpu.matmul %37, %38, %cst_35 {dimension_numbers = #tpu.dot_dimension_numbers<[1], [0], [0], [1], [0, 0, 1, 1], [], []>} : vector<32x32xf32>, vector<32x32xf32>, vector<32x32xf32> -> vector<32x32xf32>
    %41 = vector.broadcast %39 : vector<1x32xf32> to vector<32x32xf32>
    %42 = arith.addf %40, %41 : vector<32x32xf32>
    %cst_36 = arith.constant dense<0.000000e+00> : vector<64x32xf32>
    %43 = tpu.matmul %0, %37, %cst_36 {dimension_numbers = #tpu.dot_dimension_numbers<[1], [0], [0], [1], [0, 0, 1, 1], [], []>} : vector<64x32xf32>, vector<32x32xf32>, vector<64x32xf32> -> vector<64x32xf32>
    %44 = vector.extract_strided_slice %43 {offsets = [0, 0], sizes = [32, 32], strides = [1, 1]} : vector<64x32xf32> to vector<32x32xf32>
    %c0_37 = arith.constant 0 : index
    %c0_38 = arith.constant 0 : index
    %c0_39 = arith.constant 0 : index
    %45 = vector.load %arg9[%c0_37, %c0_38, %c0_39] : memref<2x32x32xf32, #tpu.memory_space<vmem>>, vector<1x32x32xf32>
    %46 = vector.shape_cast %45 : vector<1x32x32xf32> to vector<32x32xf32>
    %cst_40 = arith.constant dense<0.000000e+00> : vector<32x32xf32>
    %47 = tpu.matmul %44, %46, %cst_40 {dimension_numbers = #tpu.dot_dimension_numbers<[1], [0], [0], [1], [0, 0, 1, 1], [], []>} : vector<32x32xf32>, vector<32x32xf32>, vector<32x32xf32> -> vector<32x32xf32>
    %48 = arith.addf %42, %47 : vector<32x32xf32>
    %49 = vector.extract_strided_slice %43 {offsets = [32, 0], sizes = [32, 32], strides = [1, 1]} : vector<64x32xf32> to vector<32x32xf32>
    %c1_41 = arith.constant 1 : index
    %c0_42 = arith.constant 0 : index
    %c0_43 = arith.constant 0 : index
    %50 = vector.load %arg9[%c1_41, %c0_42, %c0_43] : memref<2x32x32xf32, #tpu.memory_space<vmem>>, vector<1x32x32xf32>
    %51 = vector.shape_cast %50 : vector<1x32x32xf32> to vector<32x32xf32>
    %cst_44 = arith.constant dense<0.000000e+00> : vector<32x32xf32>
    %52 = tpu.matmul %49, %51, %cst_44 {dimension_numbers = #tpu.dot_dimension_numbers<[1], [0], [0], [1], [0, 0, 1, 1], [], []>} : vector<32x32xf32>, vector<32x32xf32>, vector<32x32xf32> -> vector<32x32xf32>
    %53 = arith.addf %48, %52 : vector<32x32xf32>
    %cst_45 = arith.constant 0.000000e+00 : f32
    %54 = vector.broadcast %cst_45 : f32 to vector<32x32xf32>
    %55 = arith.maximumf %53, %54 : vector<32x32xf32>
    %c0_46 = arith.constant 0 : index
    %c0_47 = arith.constant 0 : index
    %56 = vector.load %arg13[%c0_46, %c0_47] : memref<32x32xf32, #tpu.memory_space<vmem>>, vector<32x32xf32>
    %c0_48 = arith.constant 0 : index
    %c0_49 = arith.constant 0 : index
    %57 = vector.load %arg14[%c0_48, %c0_49] : memref<1x32xf32, #tpu.memory_space<vmem>>, vector<1x32xf32>
    %cst_50 = arith.constant dense<0.000000e+00> : vector<32x32xf32>
    %58 = tpu.matmul %55, %56, %cst_50 {dimension_numbers = #tpu.dot_dimension_numbers<[1], [0], [0], [1], [0, 0, 1, 1], [], []>} : vector<32x32xf32>, vector<32x32xf32>, vector<32x32xf32> -> vector<32x32xf32>
    %59 = vector.broadcast %57 : vector<1x32xf32> to vector<32x32xf32>
    %60 = arith.addf %58, %59 : vector<32x32xf32>
    %cst_51 = arith.constant dense<0.000000e+00> : vector<64x32xf32>
    %61 = tpu.matmul %0, %55, %cst_51 {dimension_numbers = #tpu.dot_dimension_numbers<[1], [0], [0], [1], [0, 0, 1, 1], [], []>} : vector<64x32xf32>, vector<32x32xf32>, vector<64x32xf32> -> vector<64x32xf32>
    %62 = vector.extract_strided_slice %61 {offsets = [0, 0], sizes = [32, 32], strides = [1, 1]} : vector<64x32xf32> to vector<32x32xf32>
    %c0_52 = arith.constant 0 : index
    %c0_53 = arith.constant 0 : index
    %c0_54 = arith.constant 0 : index
    %63 = vector.load %arg12[%c0_52, %c0_53, %c0_54] : memref<2x32x32xf32, #tpu.memory_space<vmem>>, vector<1x32x32xf32>
    %64 = vector.shape_cast %63 : vector<1x32x32xf32> to vector<32x32xf32>
    %cst_55 = arith.constant dense<0.000000e+00> : vector<32x32xf32>
    %65 = tpu.matmul %62, %64, %cst_55 {dimension_numbers = #tpu.dot_dimension_numbers<[1], [0], [0], [1], [0, 0, 1, 1], [], []>} : vector<32x32xf32>, vector<32x32xf32>, vector<32x32xf32> -> vector<32x32xf32>
    %66 = arith.addf %60, %65 : vector<32x32xf32>
    %67 = vector.extract_strided_slice %61 {offsets = [32, 0], sizes = [32, 32], strides = [1, 1]} : vector<64x32xf32> to vector<32x32xf32>
    %c1_56 = arith.constant 1 : index
    %c0_57 = arith.constant 0 : index
    %c0_58 = arith.constant 0 : index
    %68 = vector.load %arg12[%c1_56, %c0_57, %c0_58] : memref<2x32x32xf32, #tpu.memory_space<vmem>>, vector<1x32x32xf32>
    %69 = vector.shape_cast %68 : vector<1x32x32xf32> to vector<32x32xf32>
    %cst_59 = arith.constant dense<0.000000e+00> : vector<32x32xf32>
    %70 = tpu.matmul %67, %69, %cst_59 {dimension_numbers = #tpu.dot_dimension_numbers<[1], [0], [0], [1], [0, 0, 1, 1], [], []>} : vector<32x32xf32>, vector<32x32xf32>, vector<32x32xf32> -> vector<32x32xf32>
    %71 = arith.addf %66, %70 : vector<32x32xf32>
    %c0_60 = arith.constant 0 : index
    %c0_61 = arith.constant 0 : index
    %72 = vector.load %arg0[%c0_60, %c0_61] : memref<8x2xi32, #tpu.memory_space<vmem>>, vector<8x1xi32>
    %c0_62 = arith.constant 0 : index
    %c1_63 = arith.constant 1 : index
    %73 = vector.load %arg0[%c0_62, %c1_63] : memref<8x2xi32, #tpu.memory_space<vmem>>, vector<8x1xi32>
    %74 = tpu.iota {dimensions = array<i32: 1>} : vector<8x64xi32>
    %75 = vector.broadcast %72 : vector<8x1xi32> to vector<8x64xi32>
    %76 = arith.cmpi eq, %74, %75 : vector<8x64xi32>
    %c32_i32 = arith.constant 32 : i32
    %77 = vector.broadcast %c32_i32 : i32 to vector<8x1xi32>
    %78 = arith.addi %73, %77 : vector<8x1xi32>
    %79 = vector.broadcast %78 : vector<8x1xi32> to vector<8x64xi32>
    %80 = arith.cmpi eq, %74, %79 : vector<8x64xi32>
    %81 = arith.ori %76, %80 : vector<8x64xi1>
    %82 = arith.extui %81 : vector<8x64xi1> to vector<8x64xi32>
    %83 = arith.sitofp %82 : vector<8x64xi32> to vector<8x64xf32>
    %c0_64 = arith.constant 0 : index
    %c0_65 = arith.constant 0 : index
    %84 = vector.load %arg15[%c0_64, %c0_65] : memref<32x32xf32, #tpu.memory_space<vmem>>, vector<32x32xf32>
    %cst_66 = arith.constant dense<0.000000e+00> : vector<32x32xf32>
    %85 = tpu.matmul %71, %84, %cst_66 {dimension_numbers = #tpu.dot_dimension_numbers<[1], [0], [0], [1], [0, 0, 1, 1], [], []>} : vector<32x32xf32>, vector<32x32xf32>, vector<32x32xf32> -> vector<32x32xf32>
    %c0_67 = arith.constant 0 : index
    %c0_68 = arith.constant 0 : index
    %86 = vector.load %arg16[%c0_67, %c0_68] : memref<32x32xf32, #tpu.memory_space<vmem>>, vector<32x32xf32>
    %cst_69 = arith.constant dense<0.000000e+00> : vector<32x32xf32>
    %87 = tpu.matmul %71, %86, %cst_69 {dimension_numbers = #tpu.dot_dimension_numbers<[1], [0], [0], [1], [0, 0, 1, 1], [], []>} : vector<32x32xf32>, vector<32x32xf32>, vector<32x32xf32> -> vector<32x32xf32>
    %88 = tpu.concatenate %85, %87 in 0 : vector<32x32xf32>, vector<32x32xf32> -> vector<64x32xf32>
    %cst_70 = arith.constant dense<0.000000e+00> : vector<8x32xf32>
    %89 = tpu.matmul %83, %88, %cst_70 {dimension_numbers = #tpu.dot_dimension_numbers<[1], [0], [0], [1], [0, 0, 1, 1], [], []>} : vector<8x64xf32>, vector<64x32xf32>, vector<8x32xf32> -> vector<8x32xf32>
    %c0_71 = arith.constant 0 : index
    %c0_72 = arith.constant 0 : index
    %90 = vector.load %arg17[%c0_71, %c0_72] : memref<1x32xf32, #tpu.memory_space<vmem>>, vector<1x32xf32>
    %91 = vector.broadcast %90 : vector<1x32xf32> to vector<8x32xf32>
    %92 = arith.addf %89, %91 : vector<8x32xf32>
    %cst_73 = arith.constant 0.000000e+00 : f32
    %93 = vector.broadcast %cst_73 : f32 to vector<8x32xf32>
    %94 = arith.maximumf %92, %93 : vector<8x32xf32>
    %c0_74 = arith.constant 0 : index
    %c0_75 = arith.constant 0 : index
    %95 = vector.load %arg18[%c0_74, %c0_75] : memref<32x32xf32, #tpu.memory_space<vmem>>, vector<32x32xf32>
    %cst_76 = arith.constant dense<0.000000e+00> : vector<8x32xf32>
    %96 = tpu.matmul %94, %95, %cst_76 {dimension_numbers = #tpu.dot_dimension_numbers<[1], [0], [0], [1], [0, 0, 1, 1], [], []>} : vector<8x32xf32>, vector<32x32xf32>, vector<8x32xf32> -> vector<8x32xf32>
    %c0_77 = arith.constant 0 : index
    %c0_78 = arith.constant 0 : index
    %97 = vector.load %arg19[%c0_77, %c0_78] : memref<1x32xf32, #tpu.memory_space<vmem>>, vector<1x32xf32>
    %98 = vector.broadcast %97 : vector<1x32xf32> to vector<8x32xf32>
    %99 = arith.addf %96, %98 : vector<8x32xf32>
    %cst_79 = arith.constant 0.000000e+00 : f32
    %100 = vector.broadcast %cst_79 : f32 to vector<8x32xf32>
    %101 = arith.maximumf %99, %100 : vector<8x32xf32>
    %c0_80 = arith.constant 0 : index
    %c0_81 = arith.constant 0 : index
    %102 = vector.load %arg20[%c0_80, %c0_81] : memref<32x32xf32, #tpu.memory_space<vmem>>, vector<32x32xf32>
    %cst_82 = arith.constant dense<0.000000e+00> : vector<8x32xf32>
    %103 = tpu.matmul %101, %102, %cst_82 {dimension_numbers = #tpu.dot_dimension_numbers<[1], [0], [0], [1], [0, 0, 1, 1], [], []>} : vector<8x32xf32>, vector<32x32xf32>, vector<8x32xf32> -> vector<8x32xf32>
    %c0_83 = arith.constant 0 : index
    %c0_84 = arith.constant 0 : index
    %104 = vector.load %arg21[%c0_83, %c0_84] : memref<1x32xf32, #tpu.memory_space<vmem>>, vector<1x32xf32>
    %105 = vector.broadcast %104 : vector<1x32xf32> to vector<8x32xf32>
    %106 = arith.addf %103, %105 : vector<8x32xf32>
    %cst_85 = arith.constant 0.000000e+00 : f32
    %107 = vector.broadcast %cst_85 : f32 to vector<8x32xf32>
    %108 = arith.maximumf %106, %107 : vector<8x32xf32>
    %c0_86 = arith.constant 0 : index
    %c0_87 = arith.constant 0 : index
    %109 = vector.load %arg22[%c0_86, %c0_87] : memref<1x32xf32, #tpu.memory_space<vmem>>, vector<1x32xf32>
    %cst_88 = arith.constant dense<0.000000e+00> : vector<1x8xf32>
    %110 = tpu.matmul %109, %108, %cst_88 {dimension_numbers = #tpu.dot_dimension_numbers<[1], [1], [0], [0], [0, 0, 1, 0], [], []>} : vector<1x32xf32>, vector<8x32xf32>, vector<1x8xf32> -> vector<1x8xf32>
    %c0_89 = arith.constant 0 : index
    %c0_90 = arith.constant 0 : index
    %111 = vector.load %arg23[%c0_89, %c0_90] : memref<1x1xf32, #tpu.memory_space<vmem>>, vector<1x1xf32>
    %112 = vector.broadcast %111 : vector<1x1xf32> to vector<1x8xf32>
    %113 = arith.addf %110, %112 : vector<1x8xf32>
    %c0_91 = arith.constant 0 : index
    %c0_92 = arith.constant 0 : index
    %114 = vector.load %arg24[%c0_91, %c0_92] : memref<1x8xf32, #tpu.memory_space<vmem>>, vector<1x8xf32>
    tpu.vector_store %arg24[%c0_91, %c0_92], %113 {strides = array<i32>} : memref<1x8xf32, #tpu.memory_space<vmem>>, vector<1x8xf32>,
    return
  }
}

</mosaic_0001>

<llo_original>
// kernel: model_forward.1
$region0: #{model_forward.1}
  #allocation0 [shape = 'u32[]', space=smem, size = 0x4, offset = 0x4, fixed_abs, tag = 'smem constant byte address 0x4 - core index']
  #allocation1 [shape = 'u32[144,128]{1,0:T(1,128)}', space=vmem, size = 0x12000, scoped, tag = 'internal scratch']
  #allocation2 [shape = 'f32[1,1]{1,0:T(1,128)S(1)}', space=vmem, size = 0x200, scoped, tag = 'scoped memory for model_forward.1']
  %s0 = inlined_call_operand.vmem [shape: s32[8,2], index: 0, kind: input, shape index: {}]
  %s1 = inlined_call_operand.vmem [shape: f32[32,16], index: 1, kind: input, shape index: {}]
  %s2 = inlined_call_operand.vmem [shape: f32[64,32], index: 2, kind: input, shape index: {}]
  %s3 = inlined_call_operand.vmem [shape: f32[2,16,32], index: 3, kind: input, shape index: {}]
  %s4 = inlined_call_operand.vmem [shape: f32[16,32], index: 4, kind: input, shape index: {}]
  %s5 = inlined_call_operand.vmem [shape: f32[1,32], index: 5, kind: input, shape index: {}]
  %s6 = inlined_call_operand.vmem [shape: f32[2,32,32], index: 6, kind: input, shape index: {}]
  %s7 = inlined_call_operand.vmem [shape: f32[32,32], index: 7, kind: input, shape index: {}]
  %s8 = inlined_call_operand.vmem [shape: f32[1,32], index: 8, kind: input, shape index: {}]
  %s9 = inlined_call_operand.vmem [shape: f32[2,32,32], index: 9, kind: input, shape index: {}]
  %s10 = inlined_call_operand.vmem [shape: f32[32,32], index: 10, kind: input, shape index: {}]
  %s11 = inlined_call_operand.vmem [shape: f32[1,32], index: 11, kind: input, shape index: {}]
  %s12 = inlined_call_operand.vmem [shape: f32[2,32,32], index: 12, kind: input, shape index: {}]
  %s13 = inlined_call_operand.vmem [shape: f32[32,32], index: 13, kind: input, shape index: {}]
  %s14 = inlined_call_operand.vmem [shape: f32[1,32], index: 14, kind: input, shape index: {}]
  %s15 = inlined_call_operand.vmem [shape: f32[32,32], index: 15, kind: input, shape index: {}]
  %s16 = inlined_call_operand.vmem [shape: f32[32,32], index: 16, kind: input, shape index: {}]
  %s17 = inlined_call_operand.vmem [shape: f32[1,32], index: 17, kind: input, shape index: {}]
  %s18 = inlined_call_operand.vmem [shape: f32[32,32], index: 18, kind: input, shape index: {}]
  %s19 = inlined_call_operand.vmem [shape: f32[1,32], index: 19, kind: input, shape index: {}]
  %s20 = inlined_call_operand.vmem [shape: f32[32,32], index: 20, kind: input, shape index: {}]
  %s21 = inlined_call_operand.vmem [shape: f32[1,32], index: 21, kind: input, shape index: {}]
  %s22 = inlined_call_operand.vmem [shape: f32[1,32], index: 22, kind: input, shape index: {}]
  %s23 = inlined_call_operand.<no memory space> [shape: f32[1,1], index: 23, kind: input, shape index: {}]
  %s24 = inlined_call_operand.hbm [shape: f32[1,8], index: 24, kind: output, shape index: {}]
  %s25 = sld [smem:[#allocation0]]
  $region106: #{model_forward.1} parent=0
    _
  %s27 = ssub.s32 1, %s25
  %s28 = scalar_select 0, %s27, %s25
  %v29 = vstv %s23
  %30 = vst [vmem:[#allocation2] sm:$0x1] %v29
  $region1: #{model_forward.1} parent=0
    #allocation3 [shape = 'u8[512]{0}', space=vmem, size = 0x400, scoped, tag = 'output window, operand 0, single buffered']
    #allocation4 [shape = 's32[1]{0}', space=sflag, size = 0x4, scoped, tag = 'scoped memory for model_forward.1']
    %31 = vsyncpa [#allocation4], 0
    // Predicated region
    $region2: #{model_forward.1} parent=1 // pred_check
      _
    $region3: #{model_forward.1} parent=1 // pred_check_branch
      %33 = sbr.rel (0) target = $region5
    $region4: #{model_forward.1} parent=1 // pred_region
      _
    $region5: #{model_forward.1} parent=1 // pred_fallthru
      _
    // Predicated region
    $region6: #{model_forward.1} parent=1 // pred_check
      _
    $region7: #{model_forward.1} parent=1 // pred_check_branch
      %35 = sbr.rel (0) target = $region9
    $region8: #{model_forward.1} parent=1 // pred_region
      _
    $region9: #{model_forward.1} parent=1 // pred_fallthru
      _
    // Predicated region
    $region10: #{model_forward.1} parent=1 // pred_check
      _
    $region11: #{model_forward.1} parent=1 // pred_check_branch
      %37 = sbr.rel (0) target = $region13
    $region12: #{model_forward.1} parent=1 // pred_region
      _
    $region13: #{model_forward.1} parent=1 // pred_fallthru
      _
    // Predicated region
    $region14: #{model_forward.1} parent=1 // pred_check
      _
    $region15: #{model_forward.1} parent=1 // pred_check_branch
      %39 = sbr.rel (0) target = $region17
    $region16: #{model_forward.1} parent=1 // pred_region
      _
    $region17: #{model_forward.1} parent=1 // pred_fallthru
      _
    // Predicated region
    $region18: #{model_forward.1} parent=1 // pred_check
      _
    $region19: #{model_forward.1} parent=1 // pred_check_branch
      %41 = sbr.rel (0) target = $region21
    $region20: #{model_forward.1} parent=1 // pred_region
      _
    $region21: #{model_forward.1} parent=1 // pred_fallthru
      _
    // Predicated region
    $region22: #{model_forward.1} parent=1 // pred_check
      _
    $region23: #{model_forward.1} parent=1 // pred_check_branch
      %43 = sbr.rel (0) target = $region25
    $region24: #{model_forward.1} parent=1 // pred_region
      _
    $region25: #{model_forward.1} parent=1 // pred_fallthru
      _
    // Predicated region
    $region26: #{model_forward.1} parent=1 // pred_check
      _
    $region27: #{model_forward.1} parent=1 // pred_check_branch
      %45 = sbr.rel (0) target = $region29
    $region28: #{model_forward.1} parent=1 // pred_region
      _
    $region29: #{model_forward.1} parent=1 // pred_fallthru
      _
    // Predicated region
    $region30: #{model_forward.1} parent=1 // pred_check
      _
    $region31: #{model_forward.1} parent=1 // pred_check_branch
      %47 = sbr.rel (0) target = $region33
    $region32: #{model_forward.1} parent=1 // pred_region
      _
    $region33: #{model_forward.1} parent=1 // pred_fallthru
      _
    // Predicated region
    $region34: #{model_forward.1} parent=1 // pred_check
      _
    $region35: #{model_forward.1} parent=1 // pred_check_branch
      %49 = sbr.rel (0) target = $region37
    $region36: #{model_forward.1} parent=1 // pred_region
      _
    $region37: #{model_forward.1} parent=1 // pred_fallthru
      _
    // Predicated region
    $region38: #{model_forward.1} parent=1 // pred_check
      _
    $region39: #{model_forward.1} parent=1 // pred_check_branch
      %51 = sbr.rel (0) target = $region41
    $region40: #{model_forward.1} parent=1 // pred_region
      _
    $region41: #{model_forward.1} parent=1 // pred_fallthru
      _
    // Predicated region
    $region42: #{model_forward.1} parent=1 // pred_check
      _
    $region43: #{model_forward.1} parent=1 // pred_check_branch
      %53 = sbr.rel (0) target = $region45
    $region44: #{model_forward.1} parent=1 // pred_region
      _
    $region45: #{model_forward.1} parent=1 // pred_fallthru
      _
    // Predicated region
    $region46: #{model_forward.1} parent=1 // pred_check
      _
    $region47: #{model_forward.1} parent=1 // pred_check_branch
      %55 = sbr.rel (0) target = $region49
    $region48: #{model_forward.1} parent=1 // pred_region
      _
    $region49: #{model_forward.1} parent=1 // pred_fallthru
      _
    // Predicated region
    $region50: #{model_forward.1} parent=1 // pred_check
      _
    $region51: #{model_forward.1} parent=1 // pred_check_branch
      %57 = sbr.rel (0) target = $region53
    $region52: #{model_forward.1} parent=1 // pred_region
      _
    $region53: #{model_forward.1} parent=1 // pred_fallthru
      _
    // Predicated region
    $region54: #{model_forward.1} parent=1 // pred_check
      _
    $region55: #{model_forward.1} parent=1 // pred_check_branch
      %59 = sbr.rel (0) target = $region57
    $region56: #{model_forward.1} parent=1 // pred_region
      _
    $region57: #{model_forward.1} parent=1 // pred_fallthru
      _
    // Predicated region
    $region58: #{model_forward.1} parent=1 // pred_check
      _
    $region59: #{model_forward.1} parent=1 // pred_check_branch
      %61 = sbr.rel (0) target = $region61
    $region60: #{model_forward.1} parent=1 // pred_region
      _
    $region61: #{model_forward.1} parent=1 // pred_fallthru
      _
    // Predicated region
    $region62: #{model_forward.1} parent=1 // pred_check
      _
    $region63: #{model_forward.1} parent=1 // pred_check_branch
      %63 = sbr.rel (0) target = $region65
    $region64: #{model_forward.1} parent=1 // pred_region
      _
    $region65: #{model_forward.1} parent=1 // pred_fallthru
      _
    // Predicated region
    $region66: #{model_forward.1} parent=1 // pred_check
      _
    $region67: #{model_forward.1} parent=1 // pred_check_branch
      %65 = sbr.rel (0) target = $region69
    $region68: #{model_forward.1} parent=1 // pred_region
      _
    $region69: #{model_forward.1} parent=1 // pred_fallthru
      _
    // Predicated region
    $region70: #{model_forward.1} parent=1 // pred_check
      _
    $region71: #{model_forward.1} parent=1 // pred_check_branch
      %67 = sbr.rel (0) target = $region73
    $region72: #{model_forward.1} parent=1 // pred_region
      _
    $region73: #{model_forward.1} parent=1 // pred_fallthru
      _
    // Predicated region
    $region74: #{model_forward.1} parent=1 // pred_check
      _
    $region75: #{model_forward.1} parent=1 // pred_check_branch
      %69 = sbr.rel (0) target = $region77
    $region76: #{model_forward.1} parent=1 // pred_region
      _
    $region77: #{model_forward.1} parent=1 // pred_fallthru
      _
    // Predicated region
    $region78: #{model_forward.1} parent=1 // pred_check
      _
    $region79: #{model_forward.1} parent=1 // pred_check_branch
      %71 = sbr.rel (0) target = $region81
    $region80: #{model_forward.1} parent=1 // pred_region
      _
    $region81: #{model_forward.1} parent=1 // pred_fallthru
      _
    // Predicated region
    $region82: #{model_forward.1} parent=1 // pred_check
      _
    $region83: #{model_forward.1} parent=1 // pred_check_branch
      %73 = sbr.rel (0) target = $region85
    $region84: #{model_forward.1} parent=1 // pred_region
      _
    $region85: #{model_forward.1} parent=1 // pred_fallthru
      _
    // Predicated region
    $region86: #{model_forward.1} parent=1 // pred_check
      _
    $region87: #{model_forward.1} parent=1 // pred_check_branch
      %75 = sbr.rel (0) target = $region89
    $region88: #{model_forward.1} parent=1 // pred_region
      _
    $region89: #{model_forward.1} parent=1 // pred_fallthru
      _
    // Predicated region
    $region90: #{model_forward.1} parent=1 // pred_check
      _
    $region91: #{model_forward.1} parent=1 // pred_check_branch
      %77 = sbr.rel (0) target = $region93
    $region92: #{model_forward.1} parent=1 // pred_region
      _
    $region93: #{model_forward.1} parent=1 // pred_fallthru
      _
    // Predicated region
    $region94: #{model_forward.1} parent=1 // pred_check
      _
    $region95: #{model_forward.1} parent=1 // pred_check_branch
      %79 = sbr.rel (0) target = $region97
    $region96: #{model_forward.1} parent=1 // pred_region
      _
    $region97: #{model_forward.1} parent=1 // pred_fallthru
      _
    %v80 = vld [vmem:[%s2] sm:$0xff]
    %v81 = vld [vmem:[%s2 + $0x8] sm:$0xff]
    %v82 = vld [vmem:[%s2 + $0x10] sm:$0xff]
    %v83 = vld [vmem:[%s2 + $0x18] sm:$0xff]
    %v84 = vld [vmem:[%s2 + $0x20] sm:$0xff]
    %v85 = vld [vmem:[%s2 + $0x28] sm:$0xff]
    %v86 = vld [vmem:[%s2 + $0x30] sm:$0xff]
    %v87 = vld [vmem:[%s2 + $0x38] sm:$0xff]
    %v88 = vld [vmem:[%s1] sm:$0xff]
    %v89 = vld [vmem:[%s1 + $0x8] sm:$0xff]
    %v90 = vld [vmem:[%s1 + $0x10] sm:$0xff]
    %v91 = vld [vmem:[%s1 + $0x18] sm:$0xff]
    %v92 = vld [vmem:[%s4] sm:$0xff]
    %v93 = vld [vmem:[%s4 + $0x8] sm:$0xff]
    %v94 = vld [vmem:[%s5] sm:$0x1]
    %v96 = vlaneseq
    %v97 = vshrl.u32 %v96, 7
    %v98 = vsub.s32 0, %v97
    %v99 = vrot.slane %v94, %v98
    %vm101 = vcmask 130048
    %v103 = vsel %vm101, %v88, 0
    %v106 = vsel %vm101, %v89, 0
    %v109 = vsel %vm101, %v90, 0
    %v112 = vsel %vm101, %v91, 0
    %114 = vmatprep.subr.mxu0 0.0
    %115 = vmatpush1.msra.mxu0 %v92
    %116 = vmatprep.subr.mxu0 0.0
    %117 = vmatpush1.msra.mxu0 %v93
    %118 = vmatprep.subr.mxu0 0.0
    %119 = vmatpush1.msra.mxu0 0.0
    %120 = vmatprep.subr.mxu0 0.0
    %121 = vmatpush1.msra.mxu0 0.0
    %122 = vmatprep.subr.mxu0 0.0
    %123 = vmatpush1.msra.mxu0 0.0
    %124 = vmatprep.subr.mxu0 0.0
    %125 = vmatpush1.msra.mxu0 0.0
    %126 = vmatprep.subr.mxu0 0.0
    %127 = vmatpush1.msra.mxu0 0.0
    %128 = vmatprep.subr.mxu0 0.0
    %129 = vmatpush1.msra.mxu0 0.0
    %130 = vmatprep.subr.mxu0 0.0
    %131 = vmatpush1.msra.mxu0 0.0
    %132 = vmatprep.subr.mxu0 0.0
    %133 = vmatpush1.msra.mxu0 0.0
    %134 = vmatprep.subr.mxu0 0.0
    %135 = vmatpush1.msra.mxu0 0.0
    %136 = vmatprep.subr.mxu0 0.0
    %137 = vmatpush1.msra.mxu0 0.0
    %138 = vmatprep.subr.mxu0 0.0
    %139 = vmatpush1.msra.mxu0 0.0
    %140 = vmatprep.subr.mxu0 0.0
    %141 = vmatpush1.msra.mxu0 0.0
    %142 = vmatprep.subr.mxu0 0.0
    %143 = vmatpush1.msra.mxu0 0.0
    %144 = vmatprep.subr.mxu0 0.0
    %145 = vmatpush1.msra.mxu0 0.0
    %146 = vmatprep.subr.mxu0 0.0
    %147 = vmatpush1.msra.mxu0 0.0
    %148 = vmatprep.subr.mxu0 0.0
    %149 = vmatpush1.msra.mxu0 0.0
    %150 = vmatprep.subr.mxu0 0.0
    %151 = vmatpush1.msra.mxu0 0.0
    %152 = vmatprep.subr.mxu0 0.0
    %153 = vmatpush1.msra.mxu0 0.0
    %154 = vmatprep.subr.mxu0 0.0
    %155 = vmatpush1.msra.mxu0 0.0
    %156 = vmatprep.subr.mxu0 0.0
    %157 = vmatpush1.msra.mxu0 0.0
    %158 = vmatprep.subr.mxu0 0.0
    %159 = vmatpush1.msra.mxu0 0.0
    %160 = vmatprep.subr.mxu0 0.0
    %161 = vmatpush1.msra.mxu0 0.0
    %162 = vmatprep.subr.mxu0 0.0
    %163 = vmatpush1.msra.mxu0 0.0
    %164 = vmatprep.subr.mxu0 0.0
    %165 = vmatpush1.msra.mxu0 0.0
    %166 = vmatprep.subr.mxu0 0.0
    %167 = vmatpush1.msra.mxu0 0.0
    %168 = vmatprep.subr.mxu0 0.0
    %169 = vmatpush1.msra.mxu0 0.0
    %170 = vmatprep.subr.mxu0 0.0
    %171 = vmatpush1.msra.mxu0 0.0
    %172 = vmatprep.subr.mxu0 0.0
    %173 = vmatpush1.msra.mxu0 0.0
    %174 = vmatprep.subr.mxu0 0.0
    %175 = vmatpush1.msra.mxu0 0.0
    %176 = vmatprep.subr.mxu0 0.0
    %177 = vmatpush1.msra.mxu0 0.0
    %178 = vmatprep.mubr.f32.mxu0 0.0
    %179 = vmatmul.mubr.f32.gmra.mrb[0].mxu0 %v103
    %v180 = vpop.f32.mrb[0].mxu0
    %v181 = vadd.f32 %v99, %v180
    %v182 = vpop.f32.mrb[0].mxu0
    %183 = vmatprep.mubr.f32.mxu0 0.0
    %184 = vmatmul.mubr.f32.gmra.mrb[0].mxu0 %v106
    %v185 = vpop.f32.mrb[0].mxu0
    %v186 = vadd.f32 %v99, %v185
    %v187 = vpop.f32.mrb[0].mxu0
    %188 = vmatprep.mubr.f32.mxu0 0.0
    %189 = vmatmul.mubr.f32.gmra.mrb[0].mxu0 %v109
    %v190 = vpop.f32.mrb[0].mxu0
    %v191 = vadd.f32 %v99, %v190
    %v192 = vpop.f32.mrb[0].mxu0
    %193 = vmatprep.mubr.f32.mxu0 0.0
    %194 = vmatmul.mubr.f32.gmra.mrb[0].mxu0 %v112
    %v195 = vpop.f32.mrb[0].mxu0
    %v196 = vadd.f32 %v99, %v195
    %v197 = vpop.f32.mrb[0].mxu0
    %198 = vdwg.mxu0
    %vm199 = vcmask 261120
    %v201 = vsel %vm199, %v80, 0
    %v204 = vsel %vm199, %v81, 0
    %v207 = vsel %vm199, %v82, 0
    %v210 = vsel %vm199, %v83, 0
    %v213 = vsel %vm199, %v84, 0
    %v216 = vsel %vm199, %v85, 0
    %v219 = vsel %vm199, %v86, 0
    %v222 = vsel %vm199, %v87, 0
    %224 = vmatprep.subr.mxu0 0.0
    %225 = vmatpush1.msra.mxu0 %v88
    %226 = vmatprep.subr.mxu0 0.0
    %227 = vmatpush1.msra.mxu0 %v89
    %228 = vmatprep.subr.mxu0 0.0
    %229 = vmatpush1.msra.mxu0 %v90
    %230 = vmatprep.subr.mxu0 0.0
    %231 = vmatpush1.msra.mxu0 %v91
    %232 = vmatprep.subr.mxu0 0.0
    %233 = vmatpush1.msra.mxu0 0.0
    %234 = vmatprep.subr.mxu0 0.0
    %235 = vmatpush1.msra.mxu0 0.0
    %236 = vmatprep.subr.mxu0 0.0
    %237 = vmatpush1.msra.mxu0 0.0
    %238 = vmatprep.subr.mxu0 0.0
    %239 = vmatpush1.msra.mxu0 0.0
    %240 = vmatprep.subr.mxu0 0.0
    %241 = vmatpush1.msra.mxu0 0.0
    %242 = vmatprep.subr.mxu0 0.0
    %243 = vmatpush1.msra.mxu0 0.0
    %244 = vmatprep.subr.mxu0 0.0
    %245 = vmatpush1.msra.mxu0 0.0
    %246 = vmatprep.subr.mxu0 0.0
    %247 = vmatpush1.msra.mxu0 0.0
    %248 = vmatprep.subr.mxu0 0.0
    %249 = vmatpush1.msra.mxu0 0.0
    %250 = vmatprep.subr.mxu0 0.0
    %251 = vmatpush1.msra.mxu0 0.0
    %252 = vmatprep.subr.mxu0 0.0
    %253 = vmatpush1.msra.mxu0 0.0
    %254 = vmatprep.subr.mxu0 0.0
    %255 = vmatpush1.msra.mxu0 0.0
    %256 = vmatprep.subr.mxu0 0.0
    %257 = vmatpush1.msra.mxu0 0.0
    %258 = vmatprep.subr.mxu0 0.0
    %259 = vmatpush1.msra.mxu0 0.0
    %260 = vmatprep.subr.mxu0 0.0
    %261 = vmatpush1.msra.mxu0 0.0
    %262 = vmatprep.subr.mxu0 0.0
    %263 = vmatpush1.msra.mxu0 0.0
    %264 = vmatprep.subr.mxu0 0.0
    %265 = vmatpush1.msra.mxu0 0.0
    %266 = vmatprep.subr.mxu0 0.0
    %267 = vmatpush1.msra.mxu0 0.0
    %268 = vmatprep.subr.mxu0 0.0
    %269 = vmatpush1.msra.mxu0 0.0
    %270 = vmatprep.subr.mxu0 0.0
    %271 = vmatpush1.msra.mxu0 0.0
    %272 = vmatprep.subr.mxu0 0.0
    %273 = vmatpush1.msra.mxu0 0.0
    %274 = vmatprep.subr.mxu0 0.0
    %275 = vmatpush1.msra.mxu0 0.0
    %276 = vmatprep.subr.mxu0 0.0
    %277 = vmatpush1.msra.mxu0 0.0
    %278 = vmatprep.subr.mxu0 0.0
    %279 = vmatpush1.msra.mxu0 0.0
    %280 = vmatprep.subr.mxu0 0.0
    %281 = vmatpush1.msra.mxu0 0.0
    %282 = vmatprep.subr.mxu0 0.0
    %283 = vmatpush1.msra.mxu0 0.0
    %284 = vmatprep.subr.mxu0 0.0
    %285 = vmatpush1.msra.mxu0 0.0
    %286 = vmatprep.subr.mxu0 0.0
    %287 = vmatpush1.msra.mxu0 0.0
    %288 = vmatprep.mubr.f32.mxu0 0.0
    %289 = vmatmul.mubr.f32.gmra.mrb[0].mxu0 %v201
    %v290 = vpop.f32.mrb[0].mxu0
    %v291 = vadd.f32 0.0, %v290
    %v292 = vpop.f32.mrb[0].mxu0
    %293 = vmatprep.mubr.f32.mxu0 0.0
    %294 = vmatmul.mubr.f32.gmra.mrb[0].mxu0 %v204
    %v295 = vpop.f32.mrb[0].mxu0
    %v296 = vadd.f32 0.0, %v295
    %v297 = vpop.f32.mrb[0].mxu0
    %298 = vmatprep.mubr.f32.mxu0 0.0
    %299 = vmatmul.mubr.f32.gmra.mrb[0].mxu0 %v207
    %v300 = vpop.f32.mrb[0].mxu0
    %v301 = vadd.f32 0.0, %v300
    %v302 = vpop.f32.mrb[0].mxu0
    %303 = vmatprep.mubr.f32.mxu0 0.0
    %304 = vmatmul.mubr.f32.gmra.mrb[0].mxu0 %v210
    %v305 = vpop.f32.mrb[0].mxu0
    %v306 = vadd.f32 0.0, %v305
    %v307 = vpop.f32.mrb[0].mxu0
    %308 = vmatprep.mubr.f32.mxu0 0.0
    %309 = vmatmul.mubr.f32.gmra.mrb[0].mxu0 %v213
    %v310 = vpop.f32.mrb[0].mxu0
    %v311 = vadd.f32 0.0, %v310
    %v312 = vpop.f32.mrb[0].mxu0
    %313 = vmatprep.mubr.f32.mxu0 0.0
    %314 = vmatmul.mubr.f32.gmra.mrb[0].mxu0 %v216
    %v315 = vpop.f32.mrb[0].mxu0
    %v316 = vadd.f32 0.0, %v315
    %v317 = vpop.f32.mrb[0].mxu0
    %318 = vmatprep.mubr.f32.mxu0 0.0
    %319 = vmatmul.mubr.f32.gmra.mrb[0].mxu0 %v219
    %v320 = vpop.f32.mrb[0].mxu0
    %v321 = vadd.f32 0.0, %v320
    %v322 = vpop.f32.mrb[0].mxu0
    %323 = vmatprep.mubr.f32.mxu0 0.0
    %324 = vmatmul.mubr.f32.gmra.mrb[0].mxu0 %v222
    %v325 = vpop.f32.mrb[0].mxu0
    %v326 = vadd.f32 0.0, %v325
    %v327 = vpop.f32.mrb[0].mxu0
    %328 = vdwg.mxu0
    %v329 = vld [vmem:[%s3] sm:$0xff]
    %v330 = vld [vmem:[%s3 + $0x8] sm:$0xff]
    %v332 = vsel %vm101, %v291, 0
    %v335 = vsel %vm101, %v296, 0
    %v338 = vsel %vm101, %v301, 0
    %v341 = vsel %vm101, %v306, 0
    %343 = vmatprep.subr.mxu0 0.0
    %344 = vmatpush1.msra.mxu0 %v329
    %345 = vmatprep.subr.mxu0 0.0
    %346 = vmatpush1.msra.mxu0 %v330
    %347 = vmatprep.subr.mxu0 0.0
    %348 = vmatpush1.msra.mxu0 0.0
    %349 = vmatprep.subr.mxu0 0.0
    %350 = vmatpush1.msra.mxu0 0.0
    %351 = vmatprep.subr.mxu0 0.0
    %352 = vmatpush1.msra.mxu0 0.0
    %353 = vmatprep.subr.mxu0 0.0
    %354 = vmatpush1.msra.mxu0 0.0
    %355 = vmatprep.subr.mxu0 0.0
    %356 = vmatpush1.msra.mxu0 0.0
    %357 = vmatprep.subr.mxu0 0.0
    %358 = vmatpush1.msra.mxu0 0.0
    %359 = vmatprep.subr.mxu0 0.0
    %360 = vmatpush1.msra.mxu0 0.0
    %361 = vmatprep.subr.mxu0 0.0
    %362 = vmatpush1.msra.mxu0 0.0
    %363 = vmatprep.subr.mxu0 0.0
    %364 = vmatpush1.msra.mxu0 0.0
    %365 = vmatprep.subr.mxu0 0.0
    %366 = vmatpush1.msra.mxu0 0.0
    %367 = vmatprep.subr.mxu0 0.0
    %368 = vmatpush1.msra.mxu0 0.0
    %369 = vmatprep.subr.mxu0 0.0
    %370 = vmatpush1.msra.mxu0 0.0
    %371 = vmatprep.subr.mxu0 0.0
    %372 = vmatpush1.msra.mxu0 0.0
    %373 = vmatprep.subr.mxu0 0.0
    %374 = vmatpush1.msra.mxu0 0.0
    %375 = vmatprep.subr.mxu0 0.0
    %376 = vmatpush1.msra.mxu0 0.0
    %377 = vmatprep.subr.mxu0 0.0
    %378 = vmatpush1.msra.mxu0 0.0
    %379 = vmatprep.subr.mxu0 0.0
    %380 = vmatpush1.msra.mxu0 0.0
    %381 = vmatprep.subr.mxu0 0.0
    %382 = vmatpush1.msra.mxu0 0.0
    %383 = vmatprep.subr.mxu0 0.0
    %384 = vmatpush1.msra.mxu0 0.0
    %385 = vmatprep.subr.mxu0 0.0
    %386 = vmatpush1.msra.mxu0 0.0
    %387 = vmatprep.subr.mxu0 0.0
    %388 = vmatpush1.msra.mxu0 0.0
    %389 = vmatprep.subr.mxu0 0.0
    %390 = vmatpush1.msra.mxu0 0.0
    %391 = vmatprep.subr.mxu0 0.0
    %392 = vmatpush1.msra.mxu0 0.0
    %393 = vmatprep.subr.mxu0 0.0
    %394 = vmatpush1.msra.mxu0 0.0
    %395 = vmatprep.subr.mxu0 0.0
    %396 = vmatpush1.msra.mxu0 0.0
    %397 = vmatprep.subr.mxu0 0.0
    %398 = vmatpush1.msra.mxu0 0.0
    %399 = vmatprep.subr.mxu0 0.0
    %400 = vmatpush1.msra.mxu0 0.0
    %401 = vmatprep.subr.mxu0 0.0
    %402 = vmatpush1.msra.mxu0 0.0
    %403 = vmatprep.subr.mxu0 0.0
    %404 = vmatpush1.msra.mxu0 0.0
    %405 = vmatprep.subr.mxu0 0.0
    %406 = vmatpush1.msra.mxu0 0.0
    %407 = vmatprep.mubr.f32.mxu0 0.0
    %408 = vmatmul.mubr.f32.gmra.mrb[0].mxu0 %v332
    %v409 = vpop.f32.mrb[0].mxu0
    %v410 = vadd.f32 0.0, %v409
    %v411 = vpop.f32.mrb[0].mxu0
    %412 = vmatprep.mubr.f32.mxu0 0.0
    %413 = vmatmul.mubr.f32.gmra.mrb[0].mxu0 %v335
    %v414 = vpop.f32.mrb[0].mxu0
    %v415 = vadd.f32 0.0, %v414
    %v416 = vpop.f32.mrb[0].mxu0
    %417 = vmatprep.mubr.f32.mxu0 0.0
    %418 = vmatmul.mubr.f32.gmra.mrb[0].mxu0 %v338
    %v419 = vpop.f32.mrb[0].mxu0
    %v420 = vadd.f32 0.0, %v419
    %v421 = vpop.f32.mrb[0].mxu0
    %422 = vmatprep.mubr.f32.mxu0 0.0
    %423 = vmatmul.mubr.f32.gmra.mrb[0].mxu0 %v341
    %v424 = vpop.f32.mrb[0].mxu0
    %v425 = vadd.f32 0.0, %v424
    %v426 = vpop.f32.mrb[0].mxu0
    %427 = vdwg.mxu0
    %v428 = vadd.f32 %v181, %v410
    %v429 = vadd.f32 %v186, %v415
    %v430 = vadd.f32 %v191, %v420
    %v431 = vadd.f32 %v196, %v425
    %s432 = scalar_lea.vmem %s3, 16
    %v433 = vld [vmem:[%s432] sm:$0xff]
    %v434 = vld [vmem:[%s432 + $0x8] sm:$0xff]
    %v436 = vsel %vm101, %v311, 0
    %v439 = vsel %vm101, %v316, 0
    %v442 = vsel %vm101, %v321, 0
    %v445 = vsel %vm101, %v326, 0
    %447 = vmatprep.subr.mxu0 0.0
    %448 = vmatpush1.msra.mxu0 %v433
    %449 = vmatprep.subr.mxu0 0.0
    %450 = vmatpush1.msra.mxu0 %v434
    %451 = vmatprep.subr.mxu0 0.0
    %452 = vmatpush1.msra.mxu0 0.0
    %453 = vmatprep.subr.mxu0 0.0
    %454 = vmatpush1.msra.mxu0 0.0
    %455 = vmatprep.subr.mxu0 0.0
    %456 = vmatpush1.msra.mxu0 0.0
    %457 = vmatprep.subr.mxu0 0.0
    %458 = vmatpush1.msra.mxu0 0.0
    %459 = vmatprep.subr.mxu0 0.0
    %460 = vmatpush1.msra.mxu0 0.0
    %461 = vmatprep.subr.mxu0 0.0
    %462 = vmatpush1.msra.mxu0 0.0
    %463 = vmatprep.subr.mxu0 0.0
    %464 = vmatpush1.msra.mxu0 0.0
    %465 = vmatprep.subr.mxu0 0.0
    %466 = vmatpush1.msra.mxu0 0.0
    %467 = vmatprep.subr.mxu0 0.0
    %468 = vmatpush1.msra.mxu0 0.0
    %469 = vmatprep.subr.mxu0 0.0
    %470 = vmatpush1.msra.mxu0 0.0
    %471 = vmatprep.subr.mxu0 0.0
    %472 = vmatpush1.msra.mxu0 0.0
    %473 = vmatprep.subr.mxu0 0.0
    %474 = vmatpush1.msra.mxu0 0.0
    %475 = vmatprep.subr.mxu0 0.0
    %476 = vmatpush1.msra.mxu0 0.0
    %477 = vmatprep.subr.mxu0 0.0
    %478 = vmatpush1.msra.mxu0 0.0
    %479 = vmatprep.subr.mxu0 0.0
    %480 = vmatpush1.msra.mxu0 0.0
    %481 = vmatprep.subr.mxu0 0.0
    %482 = vmatpush1.msra.mxu0 0.0
    %483 = vmatprep.subr.mxu0 0.0
    %484 = vmatpush1.msra.mxu0 0.0
    %485 = vmatprep.subr.mxu0 0.0
    %486 = vmatpush1.msra.mxu0 0.0
    %487 = vmatprep.subr.mxu0 0.0
    %488 = vmatpush1.msra.mxu0 0.0
    %489 = vmatprep.subr.mxu0 0.0
    %490 = vmatpush1.msra.mxu0 0.0
    %491 = vmatprep.subr.mxu0 0.0
    %492 = vmatpush1.msra.mxu0 0.0
    %493 = vmatprep.subr.mxu0 0.0
    %494 = vmatpush1.msra.mxu0 0.0
    %495 = vmatprep.subr.mxu0 0.0
    %496 = vmatpush1.msra.mxu0 0.0
    %497 = vmatprep.subr.mxu0 0.0
    %498 = vmatpush1.msra.mxu0 0.0
    %499 = vmatprep.subr.mxu0 0.0
    %500 = vmatpush1.msra.mxu0 0.0
    %501 = vmatprep.subr.mxu0 0.0
    %502 = vmatpush1.msra.mxu0 0.0
    %503 = vmatprep.subr.mxu0 0.0
    %504 = vmatpush1.msra.mxu0 0.0
    %505 = vmatprep.subr.mxu0 0.0
    %506 = vmatpush1.msra.mxu0 0.0
    %507 = vmatprep.subr.mxu0 0.0
    %508 = vmatpush1.msra.mxu0 0.0
    %509 = vmatprep.subr.mxu0 0.0
    %510 = vmatpush1.msra.mxu0 0.0
    %511 = vmatprep.mubr.f32.mxu0 0.0
    %512 = vmatmul.mubr.f32.gmra.mrb[0].mxu0 %v436
    %v513 = vpop.f32.mrb[0].mxu0
    %v514 = vadd.f32 0.0, %v513
    %v515 = vpop.f32.mrb[0].mxu0
    %516 = vmatprep.mubr.f32.mxu0 0.0
    %517 = vmatmul.mubr.f32.gmra.mrb[0].mxu0 %v439
    %v518 = vpop.f32.mrb[0].mxu0
    %v519 = vadd.f32 0.0, %v518
    %v520 = vpop.f32.mrb[0].mxu0
    %521 = vmatprep.mubr.f32.mxu0 0.0
    %522 = vmatmul.mubr.f32.gmra.mrb[0].mxu0 %v442
    %v523 = vpop.f32.mrb[0].mxu0
    %v524 = vadd.f32 0.0, %v523
    %v525 = vpop.f32.mrb[0].mxu0
    %526 = vmatprep.mubr.f32.mxu0 0.0
    %527 = vmatmul.mubr.f32.gmra.mrb[0].mxu0 %v445
    %v528 = vpop.f32.mrb[0].mxu0
    %v529 = vadd.f32 0.0, %v528
    %v530 = vpop.f32.mrb[0].mxu0
    %531 = vdwg.mxu0
    %v532 = vadd.f32 %v428, %v514
    %v533 = vadd.f32 %v429, %v519
    %v534 = vadd.f32 %v430, %v524
    %v535 = vadd.f32 %v431, %v529
    %v536 = vmax.f32 %v532, 0.0
    %v537 = vmax.f32 %v533, 0.0
    %v538 = vmax.f32 %v534, 0.0
    %v539 = vmax.f32 %v535, 0.0
    %v540 = vld [vmem:[%s7] sm:$0xff]
    %v541 = vld [vmem:[%s7 + $0x8] sm:$0xff]
    %v542 = vld [vmem:[%s7 + $0x10] sm:$0xff]
    %v543 = vld [vmem:[%s7 + $0x18] sm:$0xff]
    %v544 = vld [vmem:[%s8] sm:$0x1]
    %v546 = vlaneseq
    %v547 = vshrl.u32 %v546, 7
    %v548 = vsub.s32 0, %v547
    %v549 = vrot.slane %v544, %v548
    %v552 = vsel %vm199, %v536, 0
    %v555 = vsel %vm199, %v537, 0
    %v558 = vsel %vm199, %v538, 0
    %v561 = vsel %vm199, %v539, 0
    %563 = vmatprep.subr.mxu0 0.0
    %564 = vmatpush1.msra.mxu0 %v540
    %565 = vmatprep.subr.mxu0 0.0
    %566 = vmatpush1.msra.mxu0 %v541
    %567 = vmatprep.subr.mxu0 0.0
    %568 = vmatpush1.msra.mxu0 %v542
    %569 = vmatprep.subr.mxu0 0.0
    %570 = vmatpush1.msra.mxu0 %v543
    %571 = vmatprep.subr.mxu0 0.0
    %572 = vmatpush1.msra.mxu0 0.0
    %573 = vmatprep.subr.mxu0 0.0
    %574 = vmatpush1.msra.mxu0 0.0
    %575 = vmatprep.subr.mxu0 0.0
    %576 = vmatpush1.msra.mxu0 0.0
    %577 = vmatprep.subr.mxu0 0.0
    %578 = vmatpush1.msra.mxu0 0.0
    %579 = vmatprep.subr.mxu0 0.0
    %580 = vmatpush1.msra.mxu0 0.0
    %581 = vmatprep.subr.mxu0 0.0
    %582 = vmatpush1.msra.mxu0 0.0
    %583 = vmatprep.subr.mxu0 0.0
    %584 = vmatpush1.msra.mxu0 0.0
    %585 = vmatprep.subr.mxu0 0.0
    %586 = vmatpush1.msra.mxu0 0.0
    %587 = vmatprep.subr.mxu0 0.0
    %588 = vmatpush1.msra.mxu0 0.0
    %589 = vmatprep.subr.mxu0 0.0
    %590 = vmatpush1.msra.mxu0 0.0
    %591 = vmatprep.subr.mxu0 0.0
    %592 = vmatpush1.msra.mxu0 0.0
    %593 = vmatprep.subr.mxu0 0.0
    %594 = vmatpush1.msra.mxu0 0.0
    %595 = vmatprep.subr.mxu0 0.0
    %596 = vmatpush1.msra.mxu0 0.0
    %597 = vmatprep.subr.mxu0 0.0
    %598 = vmatpush1.msra.mxu0 0.0
    %599 = vmatprep.subr.mxu0 0.0
    %600 = vmatpush1.msra.mxu0 0.0
    %601 = vmatprep.subr.mxu0 0.0
    %602 = vmatpush1.msra.mxu0 0.0
    %603 = vmatprep.subr.mxu0 0.0
    %604 = vmatpush1.msra.mxu0 0.0
    %605 = vmatprep.subr.mxu0 0.0
    %606 = vmatpush1.msra.mxu0 0.0
    %607 = vmatprep.subr.mxu0 0.0
    %608 = vmatpush1.msra.mxu0 0.0
    %609 = vmatprep.subr.mxu0 0.0
    %610 = vmatpush1.msra.mxu0 0.0
    %611 = vmatprep.subr.mxu0 0.0
    %612 = vmatpush1.msra.mxu0 0.0
    %613 = vmatprep.subr.mxu0 0.0
    %614 = vmatpush1.msra.mxu0 0.0
    %615 = vmatprep.subr.mxu0 0.0
    %616 = vmatpush1.msra.mxu0 0.0
    %617 = vmatprep.subr.mxu0 0.0
    %618 = vmatpush1.msra.mxu0 0.0
    %619 = vmatprep.subr.mxu0 0.0
    %620 = vmatpush1.msra.mxu0 0.0
    %621 = vmatprep.subr.mxu0 0.0
    %622 = vmatpush1.msra.mxu0 0.0
    %623 = vmatprep.subr.mxu0 0.0
    %624 = vmatpush1.msra.mxu0 0.0
    %625 = vmatprep.subr.mxu0 0.0
    %626 = vmatpush1.msra.mxu0 0.0
    %627 = vmatprep.mubr.f32.mxu0 0.0
    %628 = vmatmul.mubr.f32.gmra.mrb[0].mxu0 %v552
    %v629 = vpop.f32.mrb[0].mxu0
    %v630 = vadd.f32 %v549, %v629
    %v631 = vpop.f32.mrb[0].mxu0
    %632 = vmatprep.mubr.f32.mxu0 0.0
    %633 = vmatmul.mubr.f32.gmra.mrb[0].mxu0 %v555
    %v634 = vpop.f32.mrb[0].mxu0
    %v635 = vadd.f32 %v549, %v634
    %v636 = vpop.f32.mrb[0].mxu0
    %637 = vmatprep.mubr.f32.mxu0 0.0
    %638 = vmatmul.mubr.f32.gmra.mrb[0].mxu0 %v558
    %v639 = vpop.f32.mrb[0].mxu0
    %v640 = vadd.f32 %v549, %v639
    %v641 = vpop.f32.mrb[0].mxu0
    %642 = vmatprep.mubr.f32.mxu0 0.0
    %643 = vmatmul.mubr.f32.gmra.mrb[0].mxu0 %v561
    %v644 = vpop.f32.mrb[0].mxu0
    %v645 = vadd.f32 %v549, %v644
    %v646 = vpop.f32.mrb[0].mxu0
    %647 = vdwg.mxu0
    %648 = vmatprep.subr.mxu0 0.0
    %649 = vmatpush1.msra.mxu0 %v536
    %650 = vmatprep.subr.mxu0 0.0
    %651 = vmatpush1.msra.mxu0 %v537
    %652 = vmatprep.subr.mxu0 0.0
    %653 = vmatpush1.msra.mxu0 %v538
    %654 = vmatprep.subr.mxu0 0.0
    %655 = vmatpush1.msra.mxu0 %v539
    %656 = vmatprep.subr.mxu0 0.0
    %657 = vmatpush1.msra.mxu0 0.0
    %658 = vmatprep.subr.mxu0 0.0
    %659 = vmatpush1.msra.mxu0 0.0
    %660 = vmatprep.subr.mxu0 0.0
    %661 = vmatpush1.msra.mxu0 0.0
    %662 = vmatprep.subr.mxu0 0.0
    %663 = vmatpush1.msra.mxu0 0.0
    %664 = vmatprep.subr.mxu0 0.0
    %665 = vmatpush1.msra.mxu0 0.0
    %666 = vmatprep.subr.mxu0 0.0
    %667 = vmatpush1.msra.mxu0 0.0
    %668 = vmatprep.subr.mxu0 0.0
    %669 = vmatpush1.msra.mxu0 0.0
    %670 = vmatprep.subr.mxu0 0.0
    %671 = vmatpush1.msra.mxu0 0.0
    %672 = vmatprep.subr.mxu0 0.0
    %673 = vmatpush1.msra.mxu0 0.0
    %674 = vmatprep.subr.mxu0 0.0
    %675 = vmatpush1.msra.mxu0 0.0
    %676 = vmatprep.subr.mxu0 0.0
    %677 = vmatpush1.msra.mxu0 0.0
    %678 = vmatprep.subr.mxu0 0.0
    %679 = vmatpush1.msra.mxu0 0.0
    %680 = vmatprep.subr.mxu0 0.0
    %681 = vmatpush1.msra.mxu0 0.0
    %682 = vmatprep.subr.mxu0 0.0
    %683 = vmatpush1.msra.mxu0 0.0
    %684 = vmatprep.subr.mxu0 0.0
    %685 = vmatpush1.msra.mxu0 0.0
    %686 = vmatprep.subr.mxu0 0.0
    %687 = vmatpush1.msra.mxu0 0.0
    %688 = vmatprep.subr.mxu0 0.0
    %689 = vmatpush1.msra.mxu0 0.0
    %690 = vmatprep.subr.mxu0 0.0
    %691 = vmatpush1.msra.mxu0 0.0
    %692 = vmatprep.subr.mxu0 0.0
    %693 = vmatpush1.msra.mxu0 0.0
    %694 = vmatprep.subr.mxu0 0.0
    %695 = vmatpush1.msra.mxu0 0.0
    %696 = vmatprep.subr.mxu0 0.0
    %697 = vmatpush1.msra.mxu0 0.0
    %698 = vmatprep.subr.mxu0 0.0
    %699 = vmatpush1.msra.mxu0 0.0
    %700 = vmatprep.subr.mxu0 0.0
    %701 = vmatpush1.msra.mxu0 0.0
    %702 = vmatprep.subr.mxu0 0.0
    %703 = vmatpush1.msra.mxu0 0.0
    %704 = vmatprep.subr.mxu0 0.0
    %705 = vmatpush1.msra.mxu0 0.0
    %706 = vmatprep.subr.mxu0 0.0
    %707 = vmatpush1.msra.mxu0 0.0
    %708 = vmatprep.subr.mxu0 0.0
    %709 = vmatpush1.msra.mxu0 0.0
    %710 = vmatprep.subr.mxu0 0.0
    %711 = vmatpush1.msra.mxu0 0.0
    %712 = vmatprep.mubr.f32.mxu0 0.0
    %713 = vmatmul.mubr.f32.gmra.mrb[0].mxu0 %v201
    %v714 = vpop.f32.mrb[0].mxu0
    %v715 = vadd.f32 0.0, %v714
    %v716 = vpop.f32.mrb[0].mxu0
    %717 = vmatprep.mubr.f32.mxu0 0.0
    %718 = vmatmul.mubr.f32.gmra.mrb[0].mxu0 %v204
    %v719 = vpop.f32.mrb[0].mxu0
    %v720 = vadd.f32 0.0, %v719
    %v721 = vpop.f32.mrb[0].mxu0
    %722 = vmatprep.mubr.f32.mxu0 0.0
    %723 = vmatmul.mubr.f32.gmra.mrb[0].mxu0 %v207
    %v724 = vpop.f32.mrb[0].mxu0
    %v725 = vadd.f32 0.0, %v724
    %v726 = vpop.f32.mrb[0].mxu0
    %727 = vmatprep.mubr.f32.mxu0 0.0
    %728 = vmatmul.mubr.f32.gmra.mrb[0].mxu0 %v210
    %v729 = vpop.f32.mrb[0].mxu0
    %v730 = vadd.f32 0.0, %v729
    %v731 = vpop.f32.mrb[0].mxu0
    %732 = vmatprep.mubr.f32.mxu0 0.0
    %733 = vmatmul.mubr.f32.gmra.mrb[0].mxu0 %v213
    %v734 = vpop.f32.mrb[0].mxu0
    %v735 = vadd.f32 0.0, %v734
    %v736 = vpop.f32.mrb[0].mxu0
    %737 = vmatprep.mubr.f32.mxu0 0.0
    %738 = vmatmul.mubr.f32.gmra.mrb[0].mxu0 %v216
    %v739 = vpop.f32.mrb[0].mxu0
    %v740 = vadd.f32 0.0, %v739
    %v741 = vpop.f32.mrb[0].mxu0
    %742 = vmatprep.mubr.f32.mxu0 0.0
    %743 = vmatmul.mubr.f32.gmra.mrb[0].mxu0 %v219
    %v744 = vpop.f32.mrb[0].mxu0
    %v745 = vadd.f32 0.0, %v744
    %v746 = vpop.f32.mrb[0].mxu0
    %747 = vmatprep.mubr.f32.mxu0 0.0
    %748 = vmatmul.mubr.f32.gmra.mrb[0].mxu0 %v222
    %v749 = vpop.f32.mrb[0].mxu0
    %v750 = vadd.f32 0.0, %v749
    %v751 = vpop.f32.mrb[0].mxu0
    %752 = vdwg.mxu0
    %v753 = vld [vmem:[%s6] sm:$0xff]
    %v754 = vld [vmem:[%s6 + $0x8] sm:$0xff]
    %v755 = vld [vmem:[%s6 + $0x10] sm:$0xff]
    %v756 = vld [vmem:[%s6 + $0x18] sm:$0xff]
    %v758 = vsel %vm199, %v715, 0
    %v761 = vsel %vm199, %v720, 0
    %v764 = vsel %vm199, %v725, 0
    %v767 = vsel %vm199, %v730, 0
    %769 = vmatprep.subr.mxu0 0.0
    %770 = vmatpush1.msra.mxu0 %v753
    %771 = vmatprep.subr.mxu0 0.0
    %772 = vmatpush1.msra.mxu0 %v754
    %773 = vmatprep.subr.mxu0 0.0
    %774 = vmatpush1.msra.mxu0 %v755
    %775 = vmatprep.subr.mxu0 0.0
    %776 = vmatpush1.msra.mxu0 %v756
    %777 = vmatprep.subr.mxu0 0.0
    %778 = vmatpush1.msra.mxu0 0.0
    %779 = vmatprep.subr.mxu0 0.0
    %780 = vmatpush1.msra.mxu0 0.0
    %781 = vmatprep.subr.mxu0 0.0
    %782 = vmatpush1.msra.mxu0 0.0
    %783 = vmatprep.subr.mxu0 0.0
    %784 = vmatpush1.msra.mxu0 0.0
    %785 = vmatprep.subr.mxu0 0.0
    %786 = vmatpush1.msra.mxu0 0.0
    %787 = vmatprep.subr.mxu0 0.0
    %788 = vmatpush1.msra.mxu0 0.0
    %789 = vmatprep.subr.mxu0 0.0
    %790 = vmatpush1.msra.mxu0 0.0
    %791 = vmatprep.subr.mxu0 0.0
    %792 = vmatpush1.msra.mxu0 0.0
    %793 = vmatprep.subr.mxu0 0.0
    %794 = vmatpush1.msra.mxu0 0.0
    %795 = vmatprep.subr.mxu0 0.0
    %796 = vmatpush1.msra.mxu0 0.0
    %797 = vmatprep.subr.mxu0 0.0
    %798 = vmatpush1.msra.mxu0 0.0
    %799 = vmatprep.subr.mxu0 0.0
    %800 = vmatpush1.msra.mxu0 0.0
    %801 = vmatprep.subr.mxu0 0.0
    %802 = vmatpush1.msra.mxu0 0.0
    %803 = vmatprep.subr.mxu0 0.0
    %804 = vmatpush1.msra.mxu0 0.0
    %805 = vmatprep.subr.mxu0 0.0
    %806 = vmatpush1.msra.mxu0 0.0
    %807 = vmatprep.subr.mxu0 0.0
    %808 = vmatpush1.msra.mxu0 0.0
    %809 = vmatprep.subr.mxu0 0.0
    %810 = vmatpush1.msra.mxu0 0.0
    %811 = vmatprep.subr.mxu0 0.0
    %812 = vmatpush1.msra.mxu0 0.0
    %813 = vmatprep.subr.mxu0 0.0
    %814 = vmatpush1.msra.mxu0 0.0
    %815 = vmatprep.subr.mxu0 0.0
    %816 = vmatpush1.msra.mxu0 0.0
    %817 = vmatprep.subr.mxu0 0.0
    %818 = vmatpush1.msra.mxu0 0.0
    %819 = vmatprep.subr.mxu0 0.0
    %820 = vmatpush1.msra.mxu0 0.0
    %821 = vmatprep.subr.mxu0 0.0
    %822 = vmatpush1.msra.mxu0 0.0
    %823 = vmatprep.subr.mxu0 0.0
    %824 = vmatpush1.msra.mxu0 0.0
    %825 = vmatprep.subr.mxu0 0.0
    %826 = vmatpush1.msra.mxu0 0.0
    %827 = vmatprep.subr.mxu0 0.0
    %828 = vmatpush1.msra.mxu0 0.0
    %829 = vmatprep.subr.mxu0 0.0
    %830 = vmatpush1.msra.mxu0 0.0
    %831 = vmatprep.subr.mxu0 0.0
    %832 = vmatpush1.msra.mxu0 0.0
    %833 = vmatprep.mubr.f32.mxu0 0.0
    %834 = vmatmul.mubr.f32.gmra.mrb[0].mxu0 %v758
    %v835 = vpop.f32.mrb[0].mxu0
    %v836 = vadd.f32 0.0, %v835
    %v837 = vpop.f32.mrb[0].mxu0
    %838 = vmatprep.mubr.f32.mxu0 0.0
    %839 = vmatmul.mubr.f32.gmra.mrb[0].mxu0 %v761
    %v840 = vpop.f32.mrb[0].mxu0
    %v841 = vadd.f32 0.0, %v840
    %v842 = vpop.f32.mrb[0].mxu0
    %843 = vmatprep.mubr.f32.mxu0 0.0
    %844 = vmatmul.mubr.f32.gmra.mrb[0].mxu0 %v764
    %v845 = vpop.f32.mrb[0].mxu0
    %v846 = vadd.f32 0.0, %v845
    %v847 = vpop.f32.mrb[0].mxu0
    %848 = vmatprep.mubr.f32.mxu0 0.0
    %849 = vmatmul.mubr.f32.gmra.mrb[0].mxu0 %v767
    %v850 = vpop.f32.mrb[0].mxu0
    %v851 = vadd.f32 0.0, %v850
    %v852 = vpop.f32.mrb[0].mxu0
    %853 = vdwg.mxu0
    %v854 = vadd.f32 %v630, %v836
    %v855 = vadd.f32 %v635, %v841
    %v856 = vadd.f32 %v640, %v846
    %v857 = vadd.f32 %v645, %v851
    %s858 = scalar_lea.vmem %s6, 32
    %v859 = vld [vmem:[%s858] sm:$0xff]
    %v860 = vld [vmem:[%s858 + $0x8] sm:$0xff]
    %v861 = vld [vmem:[%s858 + $0x10] sm:$0xff]
    %v862 = vld [vmem:[%s858 + $0x18] sm:$0xff]
    %v864 = vsel %vm199, %v735, 0
    %v867 = vsel %vm199, %v740, 0
    %v870 = vsel %vm199, %v745, 0
    %v873 = vsel %vm199, %v750, 0
    %875 = vmatprep.subr.mxu0 0.0
    %876 = vmatpush1.msra.mxu0 %v859
    %877 = vmatprep.subr.mxu0 0.0
    %878 = vmatpush1.msra.mxu0 %v860
    %879 = vmatprep.subr.mxu0 0.0
    %880 = vmatpush1.msra.mxu0 %v861
    %881 = vmatprep.subr.mxu0 0.0
    %882 = vmatpush1.msra.mxu0 %v862
    %883 = vmatprep.subr.mxu0 0.0
    %884 = vmatpush1.msra.mxu0 0.0
    %885 = vmatprep.subr.mxu0 0.0
    %886 = vmatpush1.msra.mxu0 0.0
    %887 = vmatprep.subr.mxu0 0.0
    %888 = vmatpush1.msra.mxu0 0.0
    %889 = vmatprep.subr.mxu0 0.0
    %890 = vmatpush1.msra.mxu0 0.0
    %891 = vmatprep.subr.mxu0 0.0
    %892 = vmatpush1.msra.mxu0 0.0
    %893 = vmatprep.subr.mxu0 0.0
    %894 = vmatpush1.msra.mxu0 0.0
    %895 = vmatprep.subr.mxu0 0.0
    %896 = vmatpush1.msra.mxu0 0.0
    %897 = vmatprep.subr.mxu0 0.0
    %898 = vmatpush1.msra.mxu0 0.0
    %899 = vmatprep.subr.mxu0 0.0
    %900 = vmatpush1.msra.mxu0 0.0
    %901 = vmatprep.subr.mxu0 0.0
    %902 = vmatpush1.msra.mxu0 0.0
    %903 = vmatprep.subr.mxu0 0.0
    %904 = vmatpush1.msra.mxu0 0.0
    %905 = vmatprep.subr.mxu0 0.0
    %906 = vmatpush1.msra.mxu0 0.0
    %907 = vmatprep.subr.mxu0 0.0
    %908 = vmatpush1.msra.mxu0 0.0
    %909 = vmatprep.subr.mxu0 0.0
    %910 = vmatpush1.msra.mxu0 0.0
    %911 = vmatprep.subr.mxu0 0.0
    %912 = vmatpush1.msra.mxu0 0.0
    %913 = vmatprep.subr.mxu0 0.0
    %914 = vmatpush1.msra.mxu0 0.0
    %915 = vmatprep.subr.mxu0 0.0
    %916 = vmatpush1.msra.mxu0 0.0
    %917 = vmatprep.subr.mxu0 0.0
    %918 = vmatpush1.msra.mxu0 0.0
    %919 = vmatprep.subr.mxu0 0.0
    %920 = vmatpush1.msra.mxu0 0.0
    %921 = vmatprep.subr.mxu0 0.0
    %922 = vmatpush1.msra.mxu0 0.0
    %923 = vmatprep.subr.mxu0 0.0
    %924 = vmatpush1.msra.mxu0 0.0
    %925 = vmatprep.subr.mxu0 0.0
    %926 = vmatpush1.msra.mxu0 0.0
    %927 = vmatprep.subr.mxu0 0.0
    %928 = vmatpush1.msra.mxu0 0.0
    %929 = vmatprep.subr.mxu0 0.0
    %930 = vmatpush1.msra.mxu0 0.0
    %931 = vmatprep.subr.mxu0 0.0
    %932 = vmatpush1.msra.mxu0 0.0
    %933 = vmatprep.subr.mxu0 0.0
    %934 = vmatpush1.msra.mxu0 0.0
    %935 = vmatprep.subr.mxu0 0.0
    %936 = vmatpush1.msra.mxu0 0.0
    %937 = vmatprep.subr.mxu0 0.0
    %938 = vmatpush1.msra.mxu0 0.0
    %939 = vmatprep.mubr.f32.mxu0 0.0
    %940 = vmatmul.mubr.f32.gmra.mrb[0].mxu0 %v864
    %v941 = vpop.f32.mrb[0].mxu0
    %v942 = vadd.f32 0.0, %v941
    %v943 = vpop.f32.mrb[0].mxu0
    %944 = vmatprep.mubr.f32.mxu0 0.0
    %945 = vmatmul.mubr.f32.gmra.mrb[0].mxu0 %v867
    %v946 = vpop.f32.mrb[0].mxu0
    %v947 = vadd.f32 0.0, %v946
    %v948 = vpop.f32.mrb[0].mxu0
    %949 = vmatprep.mubr.f32.mxu0 0.0
    %950 = vmatmul.mubr.f32.gmra.mrb[0].mxu0 %v870
    %v951 = vpop.f32.mrb[0].mxu0
    %v952 = vadd.f32 0.0, %v951
    %v953 = vpop.f32.mrb[0].mxu0
    %954 = vmatprep.mubr.f32.mxu0 0.0
    %955 = vmatmul.mubr.f32.gmra.mrb[0].mxu0 %v873
    %v956 = vpop.f32.mrb[0].mxu0
    %v957 = vadd.f32 0.0, %v956
    %v958 = vpop.f32.mrb[0].mxu0
    %959 = vdwg.mxu0
    %v960 = vadd.f32 %v854, %v942
    %v961 = vadd.f32 %v855, %v947
    %v962 = vadd.f32 %v856, %v952
    %v963 = vadd.f32 %v857, %v957
    %v964 = vmax.f32 %v960, 0.0
    %v965 = vmax.f32 %v961, 0.0
    %v966 = vmax.f32 %v962, 0.0
    %v967 = vmax.f32 %v963, 0.0
    %v968 = vld [vmem:[%s10] sm:$0xff]
    %v969 = vld [vmem:[%s10 + $0x8] sm:$0xff]
    %v970 = vld [vmem:[%s10 + $0x10] sm:$0xff]
    %v971 = vld [vmem:[%s10 + $0x18] sm:$0xff]
    %v972 = vld [vmem:[%s11] sm:$0x1]
    %v974 = vlaneseq
    %v975 = vshrl.u32 %v974, 7
    %v976 = vsub.s32 0, %v975
    %v977 = vrot.slane %v972, %v976
    %v980 = vsel %vm199, %v964, 0
    %v983 = vsel %vm199, %v965, 0
    %v986 = vsel %vm199, %v966, 0
    %v989 = vsel %vm199, %v967, 0
    %991 = vmatprep.subr.mxu0 0.0
    %992 = vmatpush1.msra.mxu0 %v968
    %993 = vmatprep.subr.mxu0 0.0
    %994 = vmatpush1.msra.mxu0 %v969
    %995 = vmatprep.subr.mxu0 0.0
    %996 = vmatpush1.msra.mxu0 %v970
    %997 = vmatprep.subr.mxu0 0.0
    %998 = vmatpush1.msra.mxu0 %v971
    %999 = vmatprep.subr.mxu0 0.0
    %1000 = vmatpush1.msra.mxu0 0.0
    %1001 = vmatprep.subr.mxu0 0.0
    %1002 = vmatpush1.msra.mxu0 0.0
    %1003 = vmatprep.subr.mxu0 0.0
    %1004 = vmatpush1.msra.mxu0 0.0
    %1005 = vmatprep.subr.mxu0 0.0
    %1006 = vmatpush1.msra.mxu0 0.0
    %1007 = vmatprep.subr.mxu0 0.0
    %1008 = vmatpush1.msra.mxu0 0.0
    %1009 = vmatprep.subr.mxu0 0.0
    %1010 = vmatpush1.msra.mxu0 0.0
    %1011 = vmatprep.subr.mxu0 0.0
    %1012 = vmatpush1.msra.mxu0 0.0
    %1013 = vmatprep.subr.mxu0 0.0
    %1014 = vmatpush1.msra.mxu0 0.0
    %1015 = vmatprep.subr.mxu0 0.0
    %1016 = vmatpush1.msra.mxu0 0.0
    %1017 = vmatprep.subr.mxu0 0.0
    %1018 = vmatpush1.msra.mxu0 0.0
    %1019 = vmatprep.subr.mxu0 0.0
    %1020 = vmatpush1.msra.mxu0 0.0
    %1021 = vmatprep.subr.mxu0 0.0
    %1022 = vmatpush1.msra.mxu0 0.0
    %1023 = vmatprep.subr.mxu0 0.0
    %1024 = vmatpush1.msra.mxu0 0.0
    %1025 = vmatprep.subr.mxu0 0.0
    %1026 = vmatpush1.msra.mxu0 0.0
    %1027 = vmatprep.subr.mxu0 0.0
    %1028 = vmatpush1.msra.mxu0 0.0
    %1029 = vmatprep.subr.mxu0 0.0
    %1030 = vmatpush1.msra.mxu0 0.0
    %1031 = vmatprep.subr.mxu0 0.0
    %1032 = vmatpush1.msra.mxu0 0.0
    %1033 = vmatprep.subr.mxu0 0.0
    %1034 = vmatpush1.msra.mxu0 0.0
    %1035 = vmatprep.subr.mxu0 0.0
    %1036 = vmatpush1.msra.mxu0 0.0
    %1037 = vmatprep.subr.mxu0 0.0
    %1038 = vmatpush1.msra.mxu0 0.0
    %1039 = vmatprep.subr.mxu0 0.0
    %1040 = vmatpush1.msra.mxu0 0.0
    %1041 = vmatprep.subr.mxu0 0.0
    %1042 = vmatpush1.msra.mxu0 0.0
    %1043 = vmatprep.subr.mxu0 0.0
    %1044 = vmatpush1.msra.mxu0 0.0
    %1045 = vmatprep.subr.mxu0 0.0
    %1046 = vmatpush1.msra.mxu0 0.0
    %1047 = vmatprep.subr.mxu0 0.0
    %1048 = vmatpush1.msra.mxu0 0.0
    %1049 = vmatprep.subr.mxu0 0.0
    %1050 = vmatpush1.msra.mxu0 0.0
    %1051 = vmatprep.subr.mxu0 0.0
    %1052 = vmatpush1.msra.mxu0 0.0
    %1053 = vmatprep.subr.mxu0 0.0
    %1054 = vmatpush1.msra.mxu0 0.0
    %1055 = vmatprep.mubr.f32.mxu0 0.0
    %1056 = vmatmul.mubr.f32.gmra.mrb[0].mxu0 %v980
    %v1057 = vpop.f32.mrb[0].mxu0
    %v1058 = vadd.f32 %v977, %v1057
    %v1059 = vpop.f32.mrb[0].mxu0
    %1060 = vmatprep.mubr.f32.mxu0 0.0
    %1061 = vmatmul.mubr.f32.gmra.mrb[0].mxu0 %v983
    %v1062 = vpop.f32.mrb[0].mxu0
    %v1063 = vadd.f32 %v977, %v1062
    %v1064 = vpop.f32.mrb[0].mxu0
    %1065 = vmatprep.mubr.f32.mxu0 0.0
    %1066 = vmatmul.mubr.f32.gmra.mrb[0].mxu0 %v986
    %v1067 = vpop.f32.mrb[0].mxu0
    %v1068 = vadd.f32 %v977, %v1067
    %v1069 = vpop.f32.mrb[0].mxu0
    %1070 = vmatprep.mubr.f32.mxu0 0.0
    %1071 = vmatmul.mubr.f32.gmra.mrb[0].mxu0 %v989
    %v1072 = vpop.f32.mrb[0].mxu0
    %v1073 = vadd.f32 %v977, %v1072
    %v1074 = vpop.f32.mrb[0].mxu0
    %1075 = vdwg.mxu0
    %1076 = vmatprep.subr.mxu0 0.0
    %1077 = vmatpush1.msra.mxu0 %v964
    %1078 = vmatprep.subr.mxu0 0.0
    %1079 = vmatpush1.msra.mxu0 %v965
    %1080 = vmatprep.subr.mxu0 0.0
    %1081 = vmatpush1.msra.mxu0 %v966
    %1082 = vmatprep.subr.mxu0 0.0
    %1083 = vmatpush1.msra.mxu0 %v967
    %1084 = vmatprep.subr.mxu0 0.0
    %1085 = vmatpush1.msra.mxu0 0.0
    %1086 = vmatprep.subr.mxu0 0.0
    %1087 = vmatpush1.msra.mxu0 0.0
    %1088 = vmatprep.subr.mxu0 0.0
    %1089 = vmatpush1.msra.mxu0 0.0
    %1090 = vmatprep.subr.mxu0 0.0
    %1091 = vmatpush1.msra.mxu0 0.0
    %1092 = vmatprep.subr.mxu0 0.0
    %1093 = vmatpush1.msra.mxu0 0.0
    %1094 = vmatprep.subr.mxu0 0.0
    %1095 = vmatpush1.msra.mxu0 0.0
    %1096 = vmatprep.subr.mxu0 0.0
    %1097 = vmatpush1.msra.mxu0 0.0
    %1098 = vmatprep.subr.mxu0 0.0
    %1099 = vmatpush1.msra.mxu0 0.0
    %1100 = vmatprep.subr.mxu0 0.0
    %1101 = vmatpush1.msra.mxu0 0.0
    %1102 = vmatprep.subr.mxu0 0.0
    %1103 = vmatpush1.msra.mxu0 0.0
    %1104 = vmatprep.subr.mxu0 0.0
    %1105 = vmatpush1.msra.mxu0 0.0
    %1106 = vmatprep.subr.mxu0 0.0
    %1107 = vmatpush1.msra.mxu0 0.0
    %1108 = vmatprep.subr.mxu0 0.0
    %1109 = vmatpush1.msra.mxu0 0.0
    %1110 = vmatprep.subr.mxu0 0.0
    %1111 = vmatpush1.msra.mxu0 0.0
    %1112 = vmatprep.subr.mxu0 0.0
    %1113 = vmatpush1.msra.mxu0 0.0
    %1114 = vmatprep.subr.mxu0 0.0
    %1115 = vmatpush1.msra.mxu0 0.0
    %1116 = vmatprep.subr.mxu0 0.0
    %1117 = vmatpush1.msra.mxu0 0.0
    %1118 = vmatprep.subr.mxu0 0.0
    %1119 = vmatpush1.msra.mxu0 0.0
    %1120 = vmatprep.subr.mxu0 0.0
    %1121 = vmatpush1.msra.mxu0 0.0
    %1122 = vmatprep.subr.mxu0 0.0
    %1123 = vmatpush1.msra.mxu0 0.0
    %1124 = vmatprep.subr.mxu0 0.0
    %1125 = vmatpush1.msra.mxu0 0.0
    %1126 = vmatprep.subr.mxu0 0.0
    %1127 = vmatpush1.msra.mxu0 0.0
    %1128 = vmatprep.subr.mxu0 0.0
    %1129 = vmatpush1.msra.mxu0 0.0
    %1130 = vmatprep.subr.mxu0 0.0
    %1131 = vmatpush1.msra.mxu0 0.0
    %1132 = vmatprep.subr.mxu0 0.0
    %1133 = vmatpush1.msra.mxu0 0.0
    %1134 = vmatprep.subr.mxu0 0.0
    %1135 = vmatpush1.msra.mxu0 0.0
    %1136 = vmatprep.subr.mxu0 0.0
    %1137 = vmatpush1.msra.mxu0 0.0
    %1138 = vmatprep.subr.mxu0 0.0
    %1139 = vmatpush1.msra.mxu0 0.0
    %1140 = vmatprep.mubr.f32.mxu0 0.0
    %1141 = vmatmul.mubr.f32.gmra.mrb[0].mxu0 %v201
    %v1142 = vpop.f32.mrb[0].mxu0
    %v1143 = vadd.f32 0.0, %v1142
    %v1144 = vpop.f32.mrb[0].mxu0
    %1145 = vmatprep.mubr.f32.mxu0 0.0
    %1146 = vmatmul.mubr.f32.gmra.mrb[0].mxu0 %v204
    %v1147 = vpop.f32.mrb[0].mxu0
    %v1148 = vadd.f32 0.0, %v1147
    %v1149 = vpop.f32.mrb[0].mxu0
    %1150 = vmatprep.mubr.f32.mxu0 0.0
    %1151 = vmatmul.mubr.f32.gmra.mrb[0].mxu0 %v207
    %v1152 = vpop.f32.mrb[0].mxu0
    %v1153 = vadd.f32 0.0, %v1152
    %v1154 = vpop.f32.mrb[0].mxu0
    %1155 = vmatprep.mubr.f32.mxu0 0.0
    %1156 = vmatmul.mubr.f32.gmra.mrb[0].mxu0 %v210
    %v1157 = vpop.f32.mrb[0].mxu0
    %v1158 = vadd.f32 0.0, %v1157
    %v1159 = vpop.f32.mrb[0].mxu0
    %1160 = vmatprep.mubr.f32.mxu0 0.0
    %1161 = vmatmul.mubr.f32.gmra.mrb[0].mxu0 %v213
    %v1162 = vpop.f32.mrb[0].mxu0
    %v1163 = vadd.f32 0.0, %v1162
    %v1164 = vpop.f32.mrb[0].mxu0
    %1165 = vmatprep.mubr.f32.mxu0 0.0
    %1166 = vmatmul.mubr.f32.gmra.mrb[0].mxu0 %v216
    %v1167 = vpop.f32.mrb[0].mxu0
    %v1168 = vadd.f32 0.0, %v1167
    %v1169 = vpop.f32.mrb[0].mxu0
    %1170 = vmatprep.mubr.f32.mxu0 0.0
    %1171 = vmatmul.mubr.f32.gmra.mrb[0].mxu0 %v219
    %v1172 = vpop.f32.mrb[0].mxu0
    %v1173 = vadd.f32 0.0, %v1172
    %v1174 = vpop.f32.mrb[0].mxu0
    %1175 = vmatprep.mubr.f32.mxu0 0.0
    %1176 = vmatmul.mubr.f32.gmra.mrb[0].mxu0 %v222
    %v1177 = vpop.f32.mrb[0].mxu0
    %v1178 = vadd.f32 0.0, %v1177
    %v1179 = vpop.f32.mrb[0].mxu0
    %1180 = vdwg.mxu0
    %v1181 = vld [vmem:[%s9] sm:$0xff]
    %v1182 = vld [vmem:[%s9 + $0x8] sm:$0xff]
    %v1183 = vld [vmem:[%s9 + $0x10] sm:$0xff]
    %v1184 = vld [vmem:[%s9 + $0x18] sm:$0xff]
    %v1186 = vsel %vm199, %v1143, 0
    %v1189 = vsel %vm199, %v1148, 0
    %v1192 = vsel %vm199, %v1153, 0
    %v1195 = vsel %vm199, %v1158, 0
    %1197 = vmatprep.subr.mxu0 0.0
    %1198 = vmatpush1.msra.mxu0 %v1181
    %1199 = vmatprep.subr.mxu0 0.0
    %1200 = vmatpush1.msra.mxu0 %v1182
    %1201 = vmatprep.subr.mxu0 0.0
    %1202 = vmatpush1.msra.mxu0 %v1183
    %1203 = vmatprep.subr.mxu0 0.0
    %1204 = vmatpush1.msra.mxu0 %v1184
    %1205 = vmatprep.subr.mxu0 0.0
    %1206 = vmatpush1.msra.mxu0 0.0
    %1207 = vmatprep.subr.mxu0 0.0
    %1208 = vmatpush1.msra.mxu0 0.0
    %1209 = vmatprep.subr.mxu0 0.0
    %1210 = vmatpush1.msra.mxu0 0.0
    %1211 = vmatprep.subr.mxu0 0.0
    %1212 = vmatpush1.msra.mxu0 0.0
    %1213 = vmatprep.subr.mxu0 0.0
    %1214 = vmatpush1.msra.mxu0 0.0
    %1215 = vmatprep.subr.mxu0 0.0
    %1216 = vmatpush1.msra.mxu0 0.0
    %1217 = vmatprep.subr.mxu0 0.0
    %1218 = vmatpush1.msra.mxu0 0.0
    %1219 = vmatprep.subr.mxu0 0.0
    %1220 = vmatpush1.msra.mxu0 0.0
    %1221 = vmatprep.subr.mxu0 0.0
    %1222 = vmatpush1.msra.mxu0 0.0
    %1223 = vmatprep.subr.mxu0 0.0
    %1224 = vmatpush1.msra.mxu0 0.0
    %1225 = vmatprep.subr.mxu0 0.0
    %1226 = vmatpush1.msra.mxu0 0.0
    %1227 = vmatprep.subr.mxu0 0.0
    %1228 = vmatpush1.msra.mxu0 0.0
    %1229 = vmatprep.subr.mxu0 0.0
    %1230 = vmatpush1.msra.mxu0 0.0
    %1231 = vmatprep.subr.mxu0 0.0
    %1232 = vmatpush1.msra.mxu0 0.0
    %1233 = vmatprep.subr.mxu0 0.0
    %1234 = vmatpush1.msra.mxu0 0.0
    %1235 = vmatprep.subr.mxu0 0.0
    %1236 = vmatpush1.msra.mxu0 0.0
    %1237 = vmatprep.subr.mxu0 0.0
    %1238 = vmatpush1.msra.mxu0 0.0
    %1239 = vmatprep.subr.mxu0 0.0
    %1240 = vmatpush1.msra.mxu0 0.0
    %1241 = vmatprep.subr.mxu0 0.0
    %1242 = vmatpush1.msra.mxu0 0.0
    %1243 = vmatprep.subr.mxu0 0.0
    %1244 = vmatpush1.msra.mxu0 0.0
    %1245 = vmatprep.subr.mxu0 0.0
    %1246 = vmatpush1.msra.mxu0 0.0
    %1247 = vmatprep.subr.mxu0 0.0
    %1248 = vmatpush1.msra.mxu0 0.0
    %1249 = vmatprep.subr.mxu0 0.0
    %1250 = vmatpush1.msra.mxu0 0.0
    %1251 = vmatprep.subr.mxu0 0.0
    %1252 = vmatpush1.msra.mxu0 0.0
    %1253 = vmatprep.subr.mxu0 0.0
    %1254 = vmatpush1.msra.mxu0 0.0
    %1255 = vmatprep.subr.mxu0 0.0
    %1256 = vmatpush1.msra.mxu0 0.0
    %1257 = vmatprep.subr.mxu0 0.0
    %1258 = vmatpush1.msra.mxu0 0.0
    %1259 = vmatprep.subr.mxu0 0.0
    %1260 = vmatpush1.msra.mxu0 0.0
    %1261 = vmatprep.mubr.f32.mxu0 0.0
    %1262 = vmatmul.mubr.f32.gmra.mrb[0].mxu0 %v1186
    %v1263 = vpop.f32.mrb[0].mxu0
    %v1264 = vadd.f32 0.0, %v1263
    %v1265 = vpop.f32.mrb[0].mxu0
    %1266 = vmatprep.mubr.f32.mxu0 0.0
    %1267 = vmatmul.mubr.f32.gmra.mrb[0].mxu0 %v1189
    %v1268 = vpop.f32.mrb[0].mxu0
    %v1269 = vadd.f32 0.0, %v1268
    %v1270 = vpop.f32.mrb[0].mxu0
    %1271 = vmatprep.mubr.f32.mxu0 0.0
    %1272 = vmatmul.mubr.f32.gmra.mrb[0].mxu0 %v1192
    %v1273 = vpop.f32.mrb[0].mxu0
    %v1274 = vadd.f32 0.0, %v1273
    %v1275 = vpop.f32.mrb[0].mxu0
    %1276 = vmatprep.mubr.f32.mxu0 0.0
    %1277 = vmatmul.mubr.f32.gmra.mrb[0].mxu0 %v1195
    %v1278 = vpop.f32.mrb[0].mxu0
    %v1279 = vadd.f32 0.0, %v1278
    %v1280 = vpop.f32.mrb[0].mxu0
    %1281 = vdwg.mxu0
    %v1282 = vadd.f32 %v1058, %v1264
    %v1283 = vadd.f32 %v1063, %v1269
    %v1284 = vadd.f32 %v1068, %v1274
    %v1285 = vadd.f32 %v1073, %v1279
    %s1286 = scalar_lea.vmem %s9, 32
    %v1287 = vld [vmem:[%s1286] sm:$0xff]
    %v1288 = vld [vmem:[%s1286 + $0x8] sm:$0xff]
    %v1289 = vld [vmem:[%s1286 + $0x10] sm:$0xff]
    %v1290 = vld [vmem:[%s1286 + $0x18] sm:$0xff]
    %v1292 = vsel %vm199, %v1163, 0
    %v1295 = vsel %vm199, %v1168, 0
    %v1298 = vsel %vm199, %v1173, 0
    %v1301 = vsel %vm199, %v1178, 0
    %1303 = vmatprep.subr.mxu0 0.0
    %1304 = vmatpush1.msra.mxu0 %v1287
    %1305 = vmatprep.subr.mxu0 0.0
    %1306 = vmatpush1.msra.mxu0 %v1288
    %1307 = vmatprep.subr.mxu0 0.0
    %1308 = vmatpush1.msra.mxu0 %v1289
    %1309 = vmatprep.subr.mxu0 0.0
    %1310 = vmatpush1.msra.mxu0 %v1290
    %1311 = vmatprep.subr.mxu0 0.0
    %1312 = vmatpush1.msra.mxu0 0.0
    %1313 = vmatprep.subr.mxu0 0.0
    %1314 = vmatpush1.msra.mxu0 0.0
    %1315 = vmatprep.subr.mxu0 0.0
    %1316 = vmatpush1.msra.mxu0 0.0
    %1317 = vmatprep.subr.mxu0 0.0
    %1318 = vmatpush1.msra.mxu0 0.0
    %1319 = vmatprep.subr.mxu0 0.0
    %1320 = vmatpush1.msra.mxu0 0.0
    %1321 = vmatprep.subr.mxu0 0.0
    %1322 = vmatpush1.msra.mxu0 0.0
    %1323 = vmatprep.subr.mxu0 0.0
    %1324 = vmatpush1.msra.mxu0 0.0
    %1325 = vmatprep.subr.mxu0 0.0
    %1326 = vmatpush1.msra.mxu0 0.0
    %1327 = vmatprep.subr.mxu0 0.0
    %1328 = vmatpush1.msra.mxu0 0.0
    %1329 = vmatprep.subr.mxu0 0.0
    %1330 = vmatpush1.msra.mxu0 0.0
    %1331 = vmatprep.subr.mxu0 0.0
    %1332 = vmatpush1.msra.mxu0 0.0
    %1333 = vmatprep.subr.mxu0 0.0
    %1334 = vmatpush1.msra.mxu0 0.0
    %1335 = vmatprep.subr.mxu0 0.0
    %1336 = vmatpush1.msra.mxu0 0.0
    %1337 = vmatprep.subr.mxu0 0.0
    %1338 = vmatpush1.msra.mxu0 0.0
    %1339 = vmatprep.subr.mxu0 0.0
    %1340 = vmatpush1.msra.mxu0 0.0
    %1341 = vmatprep.subr.mxu0 0.0
    %1342 = vmatpush1.msra.mxu0 0.0
    %1343 = vmatprep.subr.mxu0 0.0
    %1344 = vmatpush1.msra.mxu0 0.0
    %1345 = vmatprep.subr.mxu0 0.0
    %1346 = vmatpush1.msra.mxu0 0.0
    %1347 = vmatprep.subr.mxu0 0.0
    %1348 = vmatpush1.msra.mxu0 0.0
    %1349 = vmatprep.subr.mxu0 0.0
    %1350 = vmatpush1.msra.mxu0 0.0
    %1351 = vmatprep.subr.mxu0 0.0
    %1352 = vmatpush1.msra.mxu0 0.0
    %1353 = vmatprep.subr.mxu0 0.0
    %1354 = vmatpush1.msra.mxu0 0.0
    %1355 = vmatprep.subr.mxu0 0.0
    %1356 = vmatpush1.msra.mxu0 0.0
    %1357 = vmatprep.subr.mxu0 0.0
    %1358 = vmatpush1.msra.mxu0 0.0
    %1359 = vmatprep.subr.mxu0 0.0
    %1360 = vmatpush1.msra.mxu0 0.0
    %1361 = vmatprep.subr.mxu0 0.0
    %1362 = vmatpush1.msra.mxu0 0.0
    %1363 = vmatprep.subr.mxu0 0.0
    %1364 = vmatpush1.msra.mxu0 0.0
    %1365 = vmatprep.subr.mxu0 0.0
    %1366 = vmatpush1.msra.mxu0 0.0
    %1367 = vmatprep.mubr.f32.mxu0 0.0
    %1368 = vmatmul.mubr.f32.gmra.mrb[0].mxu0 %v1292
    %v1369 = vpop.f32.mrb[0].mxu0
    %v1370 = vadd.f32 0.0, %v1369
    %v1371 = vpop.f32.mrb[0].mxu0
    %1372 = vmatprep.mubr.f32.mxu0 0.0
    %1373 = vmatmul.mubr.f32.gmra.mrb[0].mxu0 %v1295
    %v1374 = vpop.f32.mrb[0].mxu0
    %v1375 = vadd.f32 0.0, %v1374
    %v1376 = vpop.f32.mrb[0].mxu0
    %1377 = vmatprep.mubr.f32.mxu0 0.0
    %1378 = vmatmul.mubr.f32.gmra.mrb[0].mxu0 %v1298
    %v1379 = vpop.f32.mrb[0].mxu0
    %v1380 = vadd.f32 0.0, %v1379
    %v1381 = vpop.f32.mrb[0].mxu0
    %1382 = vmatprep.mubr.f32.mxu0 0.0
    %1383 = vmatmul.mubr.f32.gmra.mrb[0].mxu0 %v1301
    %v1384 = vpop.f32.mrb[0].mxu0
    %v1385 = vadd.f32 0.0, %v1384
    %v1386 = vpop.f32.mrb[0].mxu0
    %1387 = vdwg.mxu0
    %v1388 = vadd.f32 %v1282, %v1370
    %v1389 = vadd.f32 %v1283, %v1375
    %v1390 = vadd.f32 %v1284, %v1380
    %v1391 = vadd.f32 %v1285, %v1385
    %v1392 = vmax.f32 %v1388, 0.0
    %v1393 = vmax.f32 %v1389, 0.0
    %v1394 = vmax.f32 %v1390, 0.0
    %v1395 = vmax.f32 %v1391, 0.0
    %v1396 = vld [vmem:[%s13] sm:$0xff]
    %v1397 = vld [vmem:[%s13 + $0x8] sm:$0xff]
    %v1398 = vld [vmem:[%s13 + $0x10] sm:$0xff]
    %v1399 = vld [vmem:[%s13 + $0x18] sm:$0xff]
    %v1400 = vld [vmem:[%s14] sm:$0x1]
    %v1402 = vlaneseq
    %v1403 = vshrl.u32 %v1402, 7
    %v1404 = vsub.s32 0, %v1403
    %v1405 = vrot.slane %v1400, %v1404
    %v1408 = vsel %vm199, %v1392, 0
    %v1411 = vsel %vm199, %v1393, 0
    %v1414 = vsel %vm199, %v1394, 0
    %v1417 = vsel %vm199, %v1395, 0
    %1419 = vmatprep.subr.mxu0 0.0
    %1420 = vmatpush1.msra.mxu0 %v1396
    %1421 = vmatprep.subr.mxu0 0.0
    %1422 = vmatpush1.msra.mxu0 %v1397
    %1423 = vmatprep.subr.mxu0 0.0
    %1424 = vmatpush1.msra.mxu0 %v1398
    %1425 = vmatprep.subr.mxu0 0.0
    %1426 = vmatpush1.msra.mxu0 %v1399
    %1427 = vmatprep.subr.mxu0 0.0
    %1428 = vmatpush1.msra.mxu0 0.0
    %1429 = vmatprep.subr.mxu0 0.0
    %1430 = vmatpush1.msra.mxu0 0.0
    %1431 = vmatprep.subr.mxu0 0.0
    %1432 = vmatpush1.msra.mxu0 0.0
    %1433 = vmatprep.subr.mxu0 0.0
    %1434 = vmatpush1.msra.mxu0 0.0
    %1435 = vmatprep.subr.mxu0 0.0
    %1436 = vmatpush1.msra.mxu0 0.0
    %1437 = vmatprep.subr.mxu0 0.0
    %1438 = vmatpush1.msra.mxu0 0.0
    %1439 = vmatprep.subr.mxu0 0.0
    %1440 = vmatpush1.msra.mxu0 0.0
    %1441 = vmatprep.subr.mxu0 0.0
    %1442 = vmatpush1.msra.mxu0 0.0
    %1443 = vmatprep.subr.mxu0 0.0
    %1444 = vmatpush1.msra.mxu0 0.0
    %1445 = vmatprep.subr.mxu0 0.0
    %1446 = vmatpush1.msra.mxu0 0.0
    %1447 = vmatprep.subr.mxu0 0.0
    %1448 = vmatpush1.msra.mxu0 0.0
    %1449 = vmatprep.subr.mxu0 0.0
    %1450 = vmatpush1.msra.mxu0 0.0
    %1451 = vmatprep.subr.mxu0 0.0
    %1452 = vmatpush1.msra.mxu0 0.0
    %1453 = vmatprep.subr.mxu0 0.0
    %1454 = vmatpush1.msra.mxu0 0.0
    %1455 = vmatprep.subr.mxu0 0.0
    %1456 = vmatpush1.msra.mxu0 0.0
    %1457 = vmatprep.subr.mxu0 0.0
    %1458 = vmatpush1.msra.mxu0 0.0
    %1459 = vmatprep.subr.mxu0 0.0
    %1460 = vmatpush1.msra.mxu0 0.0
    %1461 = vmatprep.subr.mxu0 0.0
    %1462 = vmatpush1.msra.mxu0 0.0
    %1463 = vmatprep.subr.mxu0 0.0
    %1464 = vmatpush1.msra.mxu0 0.0
    %1465 = vmatprep.subr.mxu0 0.0
    %1466 = vmatpush1.msra.mxu0 0.0
    %1467 = vmatprep.subr.mxu0 0.0
    %1468 = vmatpush1.msra.mxu0 0.0
    %1469 = vmatprep.subr.mxu0 0.0
    %1470 = vmatpush1.msra.mxu0 0.0
    %1471 = vmatprep.subr.mxu0 0.0
    %1472 = vmatpush1.msra.mxu0 0.0
    %1473 = vmatprep.subr.mxu0 0.0
    %1474 = vmatpush1.msra.mxu0 0.0
    %1475 = vmatprep.subr.mxu0 0.0
    %1476 = vmatpush1.msra.mxu0 0.0
    %1477 = vmatprep.subr.mxu0 0.0
    %1478 = vmatpush1.msra.mxu0 0.0
    %1479 = vmatprep.subr.mxu0 0.0
    %1480 = vmatpush1.msra.mxu0 0.0
    %1481 = vmatprep.subr.mxu0 0.0
    %1482 = vmatpush1.msra.mxu0 0.0
    %1483 = vmatprep.mubr.f32.mxu0 0.0
    %1484 = vmatmul.mubr.f32.gmra.mrb[0].mxu0 %v1408
    %v1485 = vpop.f32.mrb[0].mxu0
    %v1486 = vadd.f32 %v1405, %v1485
    %v1487 = vpop.f32.mrb[0].mxu0
    %1488 = vmatprep.mubr.f32.mxu0 0.0
    %1489 = vmatmul.mubr.f32.gmra.mrb[0].mxu0 %v1411
    %v1490 = vpop.f32.mrb[0].mxu0
    %v1491 = vadd.f32 %v1405, %v1490
    %v1492 = vpop.f32.mrb[0].mxu0
    %1493 = vmatprep.mubr.f32.mxu0 0.0
    %1494 = vmatmul.mubr.f32.gmra.mrb[0].mxu0 %v1414
    %v1495 = vpop.f32.mrb[0].mxu0
    %v1496 = vadd.f32 %v1405, %v1495
    %v1497 = vpop.f32.mrb[0].mxu0
    %1498 = vmatprep.mubr.f32.mxu0 0.0
    %1499 = vmatmul.mubr.f32.gmra.mrb[0].mxu0 %v1417
    %v1500 = vpop.f32.mrb[0].mxu0
    %v1501 = vadd.f32 %v1405, %v1500
    %v1502 = vpop.f32.mrb[0].mxu0
    %1503 = vdwg.mxu0
    %1504 = vmatprep.subr.mxu0 0.0
    %1505 = vmatpush1.msra.mxu0 %v1392
    %1506 = vmatprep.subr.mxu0 0.0
    %1507 = vmatpush1.msra.mxu0 %v1393
    %1508 = vmatprep.subr.mxu0 0.0
    %1509 = vmatpush1.msra.mxu0 %v1394
    %1510 = vmatprep.subr.mxu0 0.0
    %1511 = vmatpush1.msra.mxu0 %v1395
    %1512 = vmatprep.subr.mxu0 0.0
    %1513 = vmatpush1.msra.mxu0 0.0
    %1514 = vmatprep.subr.mxu0 0.0
    %1515 = vmatpush1.msra.mxu0 0.0
    %1516 = vmatprep.subr.mxu0 0.0
    %1517 = vmatpush1.msra.mxu0 0.0
    %1518 = vmatprep.subr.mxu0 0.0
    %1519 = vmatpush1.msra.mxu0 0.0
    %1520 = vmatprep.subr.mxu0 0.0
    %1521 = vmatpush1.msra.mxu0 0.0
    %1522 = vmatprep.subr.mxu0 0.0
    %1523 = vmatpush1.msra.mxu0 0.0
    %1524 = vmatprep.subr.mxu0 0.0
    %1525 = vmatpush1.msra.mxu0 0.0
    %1526 = vmatprep.subr.mxu0 0.0
    %1527 = vmatpush1.msra.mxu0 0.0
    %1528 = vmatprep.subr.mxu0 0.0
    %1529 = vmatpush1.msra.mxu0 0.0
    %1530 = vmatprep.subr.mxu0 0.0
    %1531 = vmatpush1.msra.mxu0 0.0
    %1532 = vmatprep.subr.mxu0 0.0
    %1533 = vmatpush1.msra.mxu0 0.0
    %1534 = vmatprep.subr.mxu0 0.0
    %1535 = vmatpush1.msra.mxu0 0.0
    %1536 = vmatprep.subr.mxu0 0.0
    %1537 = vmatpush1.msra.mxu0 0.0
    %1538 = vmatprep.subr.mxu0 0.0
    %1539 = vmatpush1.msra.mxu0 0.0
    %1540 = vmatprep.subr.mxu0 0.0
    %1541 = vmatpush1.msra.mxu0 0.0
    %1542 = vmatprep.subr.mxu0 0.0
    %1543 = vmatpush1.msra.mxu0 0.0
    %1544 = vmatprep.subr.mxu0 0.0
    %1545 = vmatpush1.msra.mxu0 0.0
    %1546 = vmatprep.subr.mxu0 0.0
    %1547 = vmatpush1.msra.mxu0 0.0
    %1548 = vmatprep.subr.mxu0 0.0
    %1549 = vmatpush1.msra.mxu0 0.0
    %1550 = vmatprep.subr.mxu0 0.0
    %1551 = vmatpush1.msra.mxu0 0.0
    %1552 = vmatprep.subr.mxu0 0.0
    %1553 = vmatpush1.msra.mxu0 0.0
    %1554 = vmatprep.subr.mxu0 0.0
    %1555 = vmatpush1.msra.mxu0 0.0
    %1556 = vmatprep.subr.mxu0 0.0
    %1557 = vmatpush1.msra.mxu0 0.0
    %1558 = vmatprep.subr.mxu0 0.0
    %1559 = vmatpush1.msra.mxu0 0.0
    %1560 = vmatprep.subr.mxu0 0.0
    %1561 = vmatpush1.msra.mxu0 0.0
    %1562 = vmatprep.subr.mxu0 0.0
    %1563 = vmatpush1.msra.mxu0 0.0
    %1564 = vmatprep.subr.mxu0 0.0
    %1565 = vmatpush1.msra.mxu0 0.0
    %1566 = vmatprep.subr.mxu0 0.0
    %1567 = vmatpush1.msra.mxu0 0.0
    %1568 = vmatprep.mubr.f32.mxu0 0.0
    %1569 = vmatmul.mubr.f32.gmra.mrb[0].mxu0 %v201
    %v1570 = vpop.f32.mrb[0].mxu0
    %v1571 = vadd.f32 0.0, %v1570
    %v1572 = vpop.f32.mrb[0].mxu0
    %1573 = vmatprep.mubr.f32.mxu0 0.0
    %1574 = vmatmul.mubr.f32.gmra.mrb[0].mxu0 %v204
    %v1575 = vpop.f32.mrb[0].mxu0
    %v1576 = vadd.f32 0.0, %v1575
    %v1577 = vpop.f32.mrb[0].mxu0
    %1578 = vmatprep.mubr.f32.mxu0 0.0
    %1579 = vmatmul.mubr.f32.gmra.mrb[0].mxu0 %v207
    %v1580 = vpop.f32.mrb[0].mxu0
    %v1581 = vadd.f32 0.0, %v1580
    %v1582 = vpop.f32.mrb[0].mxu0
    %1583 = vmatprep.mubr.f32.mxu0 0.0
    %1584 = vmatmul.mubr.f32.gmra.mrb[0].mxu0 %v210
    %v1585 = vpop.f32.mrb[0].mxu0
    %v1586 = vadd.f32 0.0, %v1585
    %v1587 = vpop.f32.mrb[0].mxu0
    %1588 = vmatprep.mubr.f32.mxu0 0.0
    %1589 = vmatmul.mubr.f32.gmra.mrb[0].mxu0 %v213
    %v1590 = vpop.f32.mrb[0].mxu0
    %v1591 = vadd.f32 0.0, %v1590
    %v1592 = vpop.f32.mrb[0].mxu0
    %1593 = vmatprep.mubr.f32.mxu0 0.0
    %1594 = vmatmul.mubr.f32.gmra.mrb[0].mxu0 %v216
    %v1595 = vpop.f32.mrb[0].mxu0
    %v1596 = vadd.f32 0.0, %v1595
    %v1597 = vpop.f32.mrb[0].mxu0
    %1598 = vmatprep.mubr.f32.mxu0 0.0
    %1599 = vmatmul.mubr.f32.gmra.mrb[0].mxu0 %v219
    %v1600 = vpop.f32.mrb[0].mxu0
    %v1601 = vadd.f32 0.0, %v1600
    %v1602 = vpop.f32.mrb[0].mxu0
    %1603 = vmatprep.mubr.f32.mxu0 0.0
    %1604 = vmatmul.mubr.f32.gmra.mrb[0].mxu0 %v222
    %v1605 = vpop.f32.mrb[0].mxu0
    %v1606 = vadd.f32 0.0, %v1605
    %v1607 = vpop.f32.mrb[0].mxu0
    %1608 = vdwg.mxu0
    %v1609 = vld [vmem:[%s12] sm:$0xff]
    %v1610 = vld [vmem:[%s12 + $0x8] sm:$0xff]
    %v1611 = vld [vmem:[%s12 + $0x10] sm:$0xff]
    %v1612 = vld [vmem:[%s12 + $0x18] sm:$0xff]
    %v1614 = vsel %vm199, %v1571, 0
    %v1617 = vsel %vm199, %v1576, 0
    %v1620 = vsel %vm199, %v1581, 0
    %v1623 = vsel %vm199, %v1586, 0
    %1625 = vmatprep.subr.mxu0 0.0
    %1626 = vmatpush1.msra.mxu0 %v1609
    %1627 = vmatprep.subr.mxu0 0.0
    %1628 = vmatpush1.msra.mxu0 %v1610
    %1629 = vmatprep.subr.mxu0 0.0
    %1630 = vmatpush1.msra.mxu0 %v1611
    %1631 = vmatprep.subr.mxu0 0.0
    %1632 = vmatpush1.msra.mxu0 %v1612
    %1633 = vmatprep.subr.mxu0 0.0
    %1634 = vmatpush1.msra.mxu0 0.0
    %1635 = vmatprep.subr.mxu0 0.0
    %1636 = vmatpush1.msra.mxu0 0.0
    %1637 = vmatprep.subr.mxu0 0.0
    %1638 = vmatpush1.msra.mxu0 0.0
    %1639 = vmatprep.subr.mxu0 0.0
    %1640 = vmatpush1.msra.mxu0 0.0
    %1641 = vmatprep.subr.mxu0 0.0
    %1642 = vmatpush1.msra.mxu0 0.0
    %1643 = vmatprep.subr.mxu0 0.0
    %1644 = vmatpush1.msra.mxu0 0.0
    %1645 = vmatprep.subr.mxu0 0.0
    %1646 = vmatpush1.msra.mxu0 0.0
    %1647 = vmatprep.subr.mxu0 0.0
    %1648 = vmatpush1.msra.mxu0 0.0
    %1649 = vmatprep.subr.mxu0 0.0
    %1650 = vmatpush1.msra.mxu0 0.0
    %1651 = vmatprep.subr.mxu0 0.0
    %1652 = vmatpush1.msra.mxu0 0.0
    %1653 = vmatprep.subr.mxu0 0.0
    %1654 = vmatpush1.msra.mxu0 0.0
    %1655 = vmatprep.subr.mxu0 0.0
    %1656 = vmatpush1.msra.mxu0 0.0
    %1657 = vmatprep.subr.mxu0 0.0
    %1658 = vmatpush1.msra.mxu0 0.0
    %1659 = vmatprep.subr.mxu0 0.0
    %1660 = vmatpush1.msra.mxu0 0.0
    %1661 = vmatprep.subr.mxu0 0.0
    %1662 = vmatpush1.msra.mxu0 0.0
    %1663 = vmatprep.subr.mxu0 0.0
    %1664 = vmatpush1.msra.mxu0 0.0
    %1665 = vmatprep.subr.mxu0 0.0
    %1666 = vmatpush1.msra.mxu0 0.0
    %1667 = vmatprep.subr.mxu0 0.0
    %1668 = vmatpush1.msra.mxu0 0.0
    %1669 = vmatprep.subr.mxu0 0.0
    %1670 = vmatpush1.msra.mxu0 0.0
    %1671 = vmatprep.subr.mxu0 0.0
    %1672 = vmatpush1.msra.mxu0 0.0
    %1673 = vmatprep.subr.mxu0 0.0
    %1674 = vmatpush1.msra.mxu0 0.0
    %1675 = vmatprep.subr.mxu0 0.0
    %1676 = vmatpush1.msra.mxu0 0.0
    %1677 = vmatprep.subr.mxu0 0.0
    %1678 = vmatpush1.msra.mxu0 0.0
    %1679 = vmatprep.subr.mxu0 0.0
    %1680 = vmatpush1.msra.mxu0 0.0
    %1681 = vmatprep.subr.mxu0 0.0
    %1682 = vmatpush1.msra.mxu0 0.0
    %1683 = vmatprep.subr.mxu0 0.0
    %1684 = vmatpush1.msra.mxu0 0.0
    %1685 = vmatprep.subr.mxu0 0.0
    %1686 = vmatpush1.msra.mxu0 0.0
    %1687 = vmatprep.subr.mxu0 0.0
    %1688 = vmatpush1.msra.mxu0 0.0
    %1689 = vmatprep.mubr.f32.mxu0 0.0
    %1690 = vmatmul.mubr.f32.gmra.mrb[0].mxu0 %v1614
    %v1691 = vpop.f32.mrb[0].mxu0
    %v1692 = vadd.f32 0.0, %v1691
    %v1693 = vpop.f32.mrb[0].mxu0
    %1694 = vmatprep.mubr.f32.mxu0 0.0
    %1695 = vmatmul.mubr.f32.gmra.mrb[0].mxu0 %v1617
    %v1696 = vpop.f32.mrb[0].mxu0
    %v1697 = vadd.f32 0.0, %v1696
    %v1698 = vpop.f32.mrb[0].mxu0
    %1699 = vmatprep.mubr.f32.mxu0 0.0
    %1700 = vmatmul.mubr.f32.gmra.mrb[0].mxu0 %v1620
    %v1701 = vpop.f32.mrb[0].mxu0
    %v1702 = vadd.f32 0.0, %v1701
    %v1703 = vpop.f32.mrb[0].mxu0
    %1704 = vmatprep.mubr.f32.mxu0 0.0
    %1705 = vmatmul.mubr.f32.gmra.mrb[0].mxu0 %v1623
    %v1706 = vpop.f32.mrb[0].mxu0
    %v1707 = vadd.f32 0.0, %v1706
    %v1708 = vpop.f32.mrb[0].mxu0
    %1709 = vdwg.mxu0
    %v1710 = vadd.f32 %v1486, %v1692
    %v1711 = vadd.f32 %v1491, %v1697
    %v1712 = vadd.f32 %v1496, %v1702
    %v1713 = vadd.f32 %v1501, %v1707
    %s1714 = scalar_lea.vmem %s12, 32
    %v1715 = vld [vmem:[%s1714] sm:$0xff]
    %v1716 = vld [vmem:[%s1714 + $0x8] sm:$0xff]
    %v1717 = vld [vmem:[%s1714 + $0x10] sm:$0xff]
    %v1718 = vld [vmem:[%s1714 + $0x18] sm:$0xff]
    %v1720 = vsel %vm199, %v1591, 0
    %v1723 = vsel %vm199, %v1596, 0
    %v1726 = vsel %vm199, %v1601, 0
    %v1729 = vsel %vm199, %v1606, 0
    %1731 = vmatprep.subr.mxu0 0.0
    %1732 = vmatpush1.msra.mxu0 %v1715
    %1733 = vmatprep.subr.mxu0 0.0
    %1734 = vmatpush1.msra.mxu0 %v1716
    %1735 = vmatprep.subr.mxu0 0.0
    %1736 = vmatpush1.msra.mxu0 %v1717
    %1737 = vmatprep.subr.mxu0 0.0
    %1738 = vmatpush1.msra.mxu0 %v1718
    %1739 = vmatprep.subr.mxu0 0.0
    %1740 = vmatpush1.msra.mxu0 0.0
    %1741 = vmatprep.subr.mxu0 0.0
    %1742 = vmatpush1.msra.mxu0 0.0
    %1743 = vmatprep.subr.mxu0 0.0
    %1744 = vmatpush1.msra.mxu0 0.0
    %1745 = vmatprep.subr.mxu0 0.0
    %1746 = vmatpush1.msra.mxu0 0.0
    %1747 = vmatprep.subr.mxu0 0.0
    %1748 = vmatpush1.msra.mxu0 0.0
    %1749 = vmatprep.subr.mxu0 0.0
    %1750 = vmatpush1.msra.mxu0 0.0
    %1751 = vmatprep.subr.mxu0 0.0
    %1752 = vmatpush1.msra.mxu0 0.0
    %1753 = vmatprep.subr.mxu0 0.0
    %1754 = vmatpush1.msra.mxu0 0.0
    %1755 = vmatprep.subr.mxu0 0.0
    %1756 = vmatpush1.msra.mxu0 0.0
    %1757 = vmatprep.subr.mxu0 0.0
    %1758 = vmatpush1.msra.mxu0 0.0
    %1759 = vmatprep.subr.mxu0 0.0
    %1760 = vmatpush1.msra.mxu0 0.0
    %1761 = vmatprep.subr.mxu0 0.0
    %1762 = vmatpush1.msra.mxu0 0.0
    %1763 = vmatprep.subr.mxu0 0.0
    %1764 = vmatpush1.msra.mxu0 0.0
    %1765 = vmatprep.subr.mxu0 0.0
    %1766 = vmatpush1.msra.mxu0 0.0
    %1767 = vmatprep.subr.mxu0 0.0
    %1768 = vmatpush1.msra.mxu0 0.0
    %1769 = vmatprep.subr.mxu0 0.0
    %1770 = vmatpush1.msra.mxu0 0.0
    %1771 = vmatprep.subr.mxu0 0.0
    %1772 = vmatpush1.msra.mxu0 0.0
    %1773 = vmatprep.subr.mxu0 0.0
    %1774 = vmatpush1.msra.mxu0 0.0
    %1775 = vmatprep.subr.mxu0 0.0
    %1776 = vmatpush1.msra.mxu0 0.0
    %1777 = vmatprep.subr.mxu0 0.0
    %1778 = vmatpush1.msra.mxu0 0.0
    %1779 = vmatprep.subr.mxu0 0.0
    %1780 = vmatpush1.msra.mxu0 0.0
    %1781 = vmatprep.subr.mxu0 0.0
    %1782 = vmatpush1.msra.mxu0 0.0
    %1783 = vmatprep.subr.mxu0 0.0
    %1784 = vmatpush1.msra.mxu0 0.0
    %1785 = vmatprep.subr.mxu0 0.0
    %1786 = vmatpush1.msra.mxu0 0.0
    %1787 = vmatprep.subr.mxu0 0.0
    %1788 = vmatpush1.msra.mxu0 0.0
    %1789 = vmatprep.subr.mxu0 0.0
    %1790 = vmatpush1.msra.mxu0 0.0
    %1791 = vmatprep.subr.mxu0 0.0
    %1792 = vmatpush1.msra.mxu0 0.0
    %1793 = vmatprep.subr.mxu0 0.0
    %1794 = vmatpush1.msra.mxu0 0.0
    %1795 = vmatprep.mubr.f32.mxu0 0.0
    %1796 = vmatmul.mubr.f32.gmra.mrb[0].mxu0 %v1720
    %v1797 = vpop.f32.mrb[0].mxu0
    %v1798 = vadd.f32 0.0, %v1797
    %v1799 = vpop.f32.mrb[0].mxu0
    %1800 = vmatprep.mubr.f32.mxu0 0.0
    %1801 = vmatmul.mubr.f32.gmra.mrb[0].mxu0 %v1723
    %v1802 = vpop.f32.mrb[0].mxu0
    %v1803 = vadd.f32 0.0, %v1802
    %v1804 = vpop.f32.mrb[0].mxu0
    %1805 = vmatprep.mubr.f32.mxu0 0.0
    %1806 = vmatmul.mubr.f32.gmra.mrb[0].mxu0 %v1726
    %v1807 = vpop.f32.mrb[0].mxu0
    %v1808 = vadd.f32 0.0, %v1807
    %v1809 = vpop.f32.mrb[0].mxu0
    %1810 = vmatprep.mubr.f32.mxu0 0.0
    %1811 = vmatmul.mubr.f32.gmra.mrb[0].mxu0 %v1729
    %v1812 = vpop.f32.mrb[0].mxu0
    %v1813 = vadd.f32 0.0, %v1812
    %v1814 = vpop.f32.mrb[0].mxu0
    %1815 = vdwg.mxu0
    %v1816 = vadd.f32 %v1710, %v1798
    %v1817 = vadd.f32 %v1711, %v1803
    %v1818 = vadd.f32 %v1712, %v1808
    %v1819 = vadd.f32 %v1713, %v1813
    %v1820 = vld [vmem:[%s0] sm:$0xff]
    %v1821 = vlaneseq
    %v1822 = vand.u32 %v1821, 127
    %1823 = vset.pattern.permute.xlu0 0
    %1824 = vperm.xlu0 %1823, %v1820
    %v1825 = vpop.permute.xlu0 %1824
    %vm1826 = vcmp.eq.s32.totalorder %v1822, %v1825
    %v1827 = vadd.s32 %v1820, 32
    %1828 = vset.pattern.permute.xlu0 1
    %1829 = vperm.xlu0 %1828, %v1827
    %v1830 = vpop.permute.xlu0 %1829
    %vm1831 = vcmp.eq.s32.totalorder %v1822, %v1830
    %vm1832 = vmor %vm1826, %vm1831
    %v1833 = vsel %vm1832, 1, 0
    %v1834 = vcvt.s32.f32 %v1833
    %v1835 = vld [vmem:[%s15] sm:$0xff]
    %v1836 = vld [vmem:[%s15 + $0x8] sm:$0xff]
    %v1837 = vld [vmem:[%s15 + $0x10] sm:$0xff]
    %v1838 = vld [vmem:[%s15 + $0x18] sm:$0xff]
    %v1840 = vsel %vm199, %v1816, 0
    %v1843 = vsel %vm199, %v1817, 0
    %v1846 = vsel %vm199, %v1818, 0
    %v1849 = vsel %vm199, %v1819, 0
    %1851 = vmatprep.subr.mxu0 0.0
    %1852 = vmatpush1.msra.mxu0 %v1835
    %1853 = vmatprep.subr.mxu0 0.0
    %1854 = vmatpush1.msra.mxu0 %v1836
    %1855 = vmatprep.subr.mxu0 0.0
    %1856 = vmatpush1.msra.mxu0 %v1837
    %1857 = vmatprep.subr.mxu0 0.0
    %1858 = vmatpush1.msra.mxu0 %v1838
    %1859 = vmatprep.subr.mxu0 0.0
    %1860 = vmatpush1.msra.mxu0 0.0
    %1861 = vmatprep.subr.mxu0 0.0
    %1862 = vmatpush1.msra.mxu0 0.0
    %1863 = vmatprep.subr.mxu0 0.0
    %1864 = vmatpush1.msra.mxu0 0.0
    %1865 = vmatprep.subr.mxu0 0.0
    %1866 = vmatpush1.msra.mxu0 0.0
    %1867 = vmatprep.subr.mxu0 0.0
    %1868 = vmatpush1.msra.mxu0 0.0
    %1869 = vmatprep.subr.mxu0 0.0
    %1870 = vmatpush1.msra.mxu0 0.0
    %1871 = vmatprep.subr.mxu0 0.0
    %1872 = vmatpush1.msra.mxu0 0.0
    %1873 = vmatprep.subr.mxu0 0.0
    %1874 = vmatpush1.msra.mxu0 0.0
    %1875 = vmatprep.subr.mxu0 0.0
    %1876 = vmatpush1.msra.mxu0 0.0
    %1877 = vmatprep.subr.mxu0 0.0
    %1878 = vmatpush1.msra.mxu0 0.0
    %1879 = vmatprep.subr.mxu0 0.0
    %1880 = vmatpush1.msra.mxu0 0.0
    %1881 = vmatprep.subr.mxu0 0.0
    %1882 = vmatpush1.msra.mxu0 0.0
    %1883 = vmatprep.subr.mxu0 0.0
    %1884 = vmatpush1.msra.mxu0 0.0
    %1885 = vmatprep.subr.mxu0 0.0
    %1886 = vmatpush1.msra.mxu0 0.0
    %1887 = vmatprep.subr.mxu0 0.0
    %1888 = vmatpush1.msra.mxu0 0.0
    %1889 = vmatprep.subr.mxu0 0.0
    %1890 = vmatpush1.msra.mxu0 0.0
    %1891 = vmatprep.subr.mxu0 0.0
    %1892 = vmatpush1.msra.mxu0 0.0
    %1893 = vmatprep.subr.mxu0 0.0
    %1894 = vmatpush1.msra.mxu0 0.0
    %1895 = vmatprep.subr.mxu0 0.0
    %1896 = vmatpush1.msra.mxu0 0.0
    %1897 = vmatprep.subr.mxu0 0.0
    %1898 = vmatpush1.msra.mxu0 0.0
    %1899 = vmatprep.subr.mxu0 0.0
    %1900 = vmatpush1.msra.mxu0 0.0
    %1901 = vmatprep.subr.mxu0 0.0
    %1902 = vmatpush1.msra.mxu0 0.0
    %1903 = vmatprep.subr.mxu0 0.0
    %1904 = vmatpush1.msra.mxu0 0.0
    %1905 = vmatprep.subr.mxu0 0.0
    %1906 = vmatpush1.msra.mxu0 0.0
    %1907 = vmatprep.subr.mxu0 0.0
    %1908 = vmatpush1.msra.mxu0 0.0
    %1909 = vmatprep.subr.mxu0 0.0
    %1910 = vmatpush1.msra.mxu0 0.0
    %1911 = vmatprep.subr.mxu0 0.0
    %1912 = vmatpush1.msra.mxu0 0.0
    %1913 = vmatprep.subr.mxu0 0.0
    %1914 = vmatpush1.msra.mxu0 0.0
    %1915 = vmatprep.mubr.f32.mxu0 0.0
    %1916 = vmatmul.mubr.f32.gmra.mrb[0].mxu0 %v1840
    %v1917 = vpop.f32.mrb[0].mxu0
    %v1918 = vadd.f32 0.0, %v1917
    %v1919 = vpop.f32.mrb[0].mxu0
    %1920 = vmatprep.mubr.f32.mxu0 0.0
    %1921 = vmatmul.mubr.f32.gmra.mrb[0].mxu0 %v1843
    %v1922 = vpop.f32.mrb[0].mxu0
    %v1923 = vadd.f32 0.0, %v1922
    %v1924 = vpop.f32.mrb[0].mxu0
    %1925 = vmatprep.mubr.f32.mxu0 0.0
    %1926 = vmatmul.mubr.f32.gmra.mrb[0].mxu0 %v1846
    %v1927 = vpop.f32.mrb[0].mxu0
    %v1928 = vadd.f32 0.0, %v1927
    %v1929 = vpop.f32.mrb[0].mxu0
    %1930 = vmatprep.mubr.f32.mxu0 0.0
    %1931 = vmatmul.mubr.f32.gmra.mrb[0].mxu0 %v1849
    %v1932 = vpop.f32.mrb[0].mxu0
    %v1933 = vadd.f32 0.0, %v1932
    %v1934 = vpop.f32.mrb[0].mxu0
    %1935 = vdwg.mxu0
    %v1936 = vld [vmem:[%s16] sm:$0xff]
    %v1937 = vld [vmem:[%s16 + $0x8] sm:$0xff]
    %v1938 = vld [vmem:[%s16 + $0x10] sm:$0xff]
    %v1939 = vld [vmem:[%s16 + $0x18] sm:$0xff]
    %1940 = vmatprep.subr.mxu0 0.0
    %1941 = vmatpush1.msra.mxu0 %v1936
    %1942 = vmatprep.subr.mxu0 0.0
    %1943 = vmatpush1.msra.mxu0 %v1937
    %1944 = vmatprep.subr.mxu0 0.0
    %1945 = vmatpush1.msra.mxu0 %v1938
    %1946 = vmatprep.subr.mxu0 0.0
    %1947 = vmatpush1.msra.mxu0 %v1939
    %1948 = vmatprep.subr.mxu0 0.0
    %1949 = vmatpush1.msra.mxu0 0.0
    %1950 = vmatprep.subr.mxu0 0.0
    %1951 = vmatpush1.msra.mxu0 0.0
    %1952 = vmatprep.subr.mxu0 0.0
    %1953 = vmatpush1.msra.mxu0 0.0
    %1954 = vmatprep.subr.mxu0 0.0
    %1955 = vmatpush1.msra.mxu0 0.0
    %1956 = vmatprep.subr.mxu0 0.0
    %1957 = vmatpush1.msra.mxu0 0.0
    %1958 = vmatprep.subr.mxu0 0.0
    %1959 = vmatpush1.msra.mxu0 0.0
    %1960 = vmatprep.subr.mxu0 0.0
    %1961 = vmatpush1.msra.mxu0 0.0
    %1962 = vmatprep.subr.mxu0 0.0
    %1963 = vmatpush1.msra.mxu0 0.0
    %1964 = vmatprep.subr.mxu0 0.0
    %1965 = vmatpush1.msra.mxu0 0.0
    %1966 = vmatprep.subr.mxu0 0.0
    %1967 = vmatpush1.msra.mxu0 0.0
    %1968 = vmatprep.subr.mxu0 0.0
    %1969 = vmatpush1.msra.mxu0 0.0
    %1970 = vmatprep.subr.mxu0 0.0
    %1971 = vmatpush1.msra.mxu0 0.0
    %1972 = vmatprep.subr.mxu0 0.0
    %1973 = vmatpush1.msra.mxu0 0.0
    %1974 = vmatprep.subr.mxu0 0.0
    %1975 = vmatpush1.msra.mxu0 0.0
    %1976 = vmatprep.subr.mxu0 0.0
    %1977 = vmatpush1.msra.mxu0 0.0
    %1978 = vmatprep.subr.mxu0 0.0
    %1979 = vmatpush1.msra.mxu0 0.0
    %1980 = vmatprep.subr.mxu0 0.0
    %1981 = vmatpush1.msra.mxu0 0.0
    %1982 = vmatprep.subr.mxu0 0.0
    %1983 = vmatpush1.msra.mxu0 0.0
    %1984 = vmatprep.subr.mxu0 0.0
    %1985 = vmatpush1.msra.mxu0 0.0
    %1986 = vmatprep.subr.mxu0 0.0
    %1987 = vmatpush1.msra.mxu0 0.0
    %1988 = vmatprep.subr.mxu0 0.0
    %1989 = vmatpush1.msra.mxu0 0.0
    %1990 = vmatprep.subr.mxu0 0.0
    %1991 = vmatpush1.msra.mxu0 0.0
    %1992 = vmatprep.subr.mxu0 0.0
    %1993 = vmatpush1.msra.mxu0 0.0
    %1994 = vmatprep.subr.mxu0 0.0
    %1995 = vmatpush1.msra.mxu0 0.0
    %1996 = vmatprep.subr.mxu0 0.0
    %1997 = vmatpush1.msra.mxu0 0.0
    %1998 = vmatprep.subr.mxu0 0.0
    %1999 = vmatpush1.msra.mxu0 0.0
    %2000 = vmatprep.subr.mxu0 0.0
    %2001 = vmatpush1.msra.mxu0 0.0
    %2002 = vmatprep.subr.mxu0 0.0
    %2003 = vmatpush1.msra.mxu0 0.0
    %2004 = vmatprep.mubr.f32.mxu0 0.0
    %2005 = vmatmul.mubr.f32.gmra.mrb[0].mxu0 %v1840
    %v2006 = vpop.f32.mrb[0].mxu0
    %v2007 = vadd.f32 0.0, %v2006
    %v2008 = vpop.f32.mrb[0].mxu0
    %2009 = vmatprep.mubr.f32.mxu0 0.0
    %2010 = vmatmul.mubr.f32.gmra.mrb[0].mxu0 %v1843
    %v2011 = vpop.f32.mrb[0].mxu0
    %v2012 = vadd.f32 0.0, %v2011
    %v2013 = vpop.f32.mrb[0].mxu0
    %2014 = vmatprep.mubr.f32.mxu0 0.0
    %2015 = vmatmul.mubr.f32.gmra.mrb[0].mxu0 %v1846
    %v2016 = vpop.f32.mrb[0].mxu0
    %v2017 = vadd.f32 0.0, %v2016
    %v2018 = vpop.f32.mrb[0].mxu0
    %2019 = vmatprep.mubr.f32.mxu0 0.0
    %2020 = vmatmul.mubr.f32.gmra.mrb[0].mxu0 %v1849
    %v2021 = vpop.f32.mrb[0].mxu0
    %v2022 = vadd.f32 0.0, %v2021
    %v2023 = vpop.f32.mrb[0].mxu0
    %2024 = vdwg.mxu0
    %v2025 = vld [vmem:[%s17] sm:$0x1]
    %v2027 = vlaneseq
    %v2028 = vshrl.u32 %v2027, 7
    %v2029 = vsub.s32 0, %v2028
    %v2030 = vrot.slane %v2025, %v2029
    %vm2032 = vcmask 523264
    %v2034 = vsel %vm2032, %v1834, 0
    %2036 = vmatprep.subr.mxu0 0.0
    %2037 = vmatpush1.msra.mxu0 %v1918
    %2038 = vmatprep.subr.mxu0 0.0
    %2039 = vmatpush1.msra.mxu0 %v1923
    %2040 = vmatprep.subr.mxu0 0.0
    %2041 = vmatpush1.msra.mxu0 %v1928
    %2042 = vmatprep.subr.mxu0 0.0
    %2043 = vmatpush1.msra.mxu0 %v1933
    %2044 = vmatprep.subr.mxu0 0.0
    %2045 = vmatpush1.msra.mxu0 %v2007
    %2046 = vmatprep.subr.mxu0 0.0
    %2047 = vmatpush1.msra.mxu0 %v2012
    %2048 = vmatprep.subr.mxu0 0.0
    %2049 = vmatpush1.msra.mxu0 %v2017
    %2050 = vmatprep.subr.mxu0 0.0
    %2051 = vmatpush1.msra.mxu0 %v2022
    %2052 = vmatprep.subr.mxu0 0.0
    %2053 = vmatpush1.msra.mxu0 0.0
    %2054 = vmatprep.subr.mxu0 0.0
    %2055 = vmatpush1.msra.mxu0 0.0
    %2056 = vmatprep.subr.mxu0 0.0
    %2057 = vmatpush1.msra.mxu0 0.0
    %2058 = vmatprep.subr.mxu0 0.0
    %2059 = vmatpush1.msra.mxu0 0.0
    %2060 = vmatprep.subr.mxu0 0.0
    %2061 = vmatpush1.msra.mxu0 0.0
    %2062 = vmatprep.subr.mxu0 0.0
    %2063 = vmatpush1.msra.mxu0 0.0
    %2064 = vmatprep.subr.mxu0 0.0
    %2065 = vmatpush1.msra.mxu0 0.0
    %2066 = vmatprep.subr.mxu0 0.0
    %2067 = vmatpush1.msra.mxu0 0.0
    %2068 = vmatprep.subr.mxu0 0.0
    %2069 = vmatpush1.msra.mxu0 0.0
    %2070 = vmatprep.subr.mxu0 0.0
    %2071 = vmatpush1.msra.mxu0 0.0
    %2072 = vmatprep.subr.mxu0 0.0
    %2073 = vmatpush1.msra.mxu0 0.0
    %2074 = vmatprep.subr.mxu0 0.0
    %2075 = vmatpush1.msra.mxu0 0.0
    %2076 = vmatprep.subr.mxu0 0.0
    %2077 = vmatpush1.msra.mxu0 0.0
    %2078 = vmatprep.subr.mxu0 0.0
    %2079 = vmatpush1.msra.mxu0 0.0
    %2080 = vmatprep.subr.mxu0 0.0
    %2081 = vmatpush1.msra.mxu0 0.0
    %2082 = vmatprep.subr.mxu0 0.0
    %2083 = vmatpush1.msra.mxu0 0.0
    %2084 = vmatprep.subr.mxu0 0.0
    %2085 = vmatpush1.msra.mxu0 0.0
    %2086 = vmatprep.subr.mxu0 0.0
    %2087 = vmatpush1.msra.mxu0 0.0
    %2088 = vmatprep.subr.mxu0 0.0
    %2089 = vmatpush1.msra.mxu0 0.0
    %2090 = vmatprep.subr.mxu0 0.0
    %2091 = vmatpush1.msra.mxu0 0.0
    %2092 = vmatprep.subr.mxu0 0.0
    %2093 = vmatpush1.msra.mxu0 0.0
    %2094 = vmatprep.subr.mxu0 0.0
    %2095 = vmatpush1.msra.mxu0 0.0
    %2096 = vmatprep.subr.mxu0 0.0
    %2097 = vmatpush1.msra.mxu0 0.0
    %2098 = vmatprep.subr.mxu0 0.0
    %2099 = vmatpush1.msra.mxu0 0.0
    %2100 = vmatprep.mubr.f32.mxu0 0.0
    %2101 = vmatmul.mubr.f32.gmra.mrb[0].mxu0 %v2034
    %v2102 = vpop.f32.mrb[0].mxu0
    %v2103 = vadd.f32 %v2030, %v2102
    %v2104 = vpop.f32.mrb[0].mxu0
    %2105 = vdwg.mxu0
    %v2106 = vmax.f32 %v2103, 0.0
    %v2107 = vld [vmem:[%s18] sm:$0xff]
    %v2108 = vld [vmem:[%s18 + $0x8] sm:$0xff]
    %v2109 = vld [vmem:[%s18 + $0x10] sm:$0xff]
    %v2110 = vld [vmem:[%s18 + $0x18] sm:$0xff]
    %v2111 = vld [vmem:[%s19] sm:$0x1]
    %v2113 = vlaneseq
    %v2114 = vshrl.u32 %v2113, 7
    %v2115 = vsub.s32 0, %v2114
    %v2116 = vrot.slane %v2111, %v2115
    %v2119 = vsel %vm199, %v2106, 0
    %2121 = vmatprep.subr.mxu0 0.0
    %2122 = vmatpush1.msra.mxu0 %v2107
    %2123 = vmatprep.subr.mxu0 0.0
    %2124 = vmatpush1.msra.mxu0 %v2108
    %2125 = vmatprep.subr.mxu0 0.0
    %2126 = vmatpush1.msra.mxu0 %v2109
    %2127 = vmatprep.subr.mxu0 0.0
    %2128 = vmatpush1.msra.mxu0 %v2110
    %2129 = vmatprep.subr.mxu0 0.0
    %2130 = vmatpush1.msra.mxu0 0.0
    %2131 = vmatprep.subr.mxu0 0.0
    %2132 = vmatpush1.msra.mxu0 0.0
    %2133 = vmatprep.subr.mxu0 0.0
    %2134 = vmatpush1.msra.mxu0 0.0
    %2135 = vmatprep.subr.mxu0 0.0
    %2136 = vmatpush1.msra.mxu0 0.0
    %2137 = vmatprep.subr.mxu0 0.0
    %2138 = vmatpush1.msra.mxu0 0.0
    %2139 = vmatprep.subr.mxu0 0.0
    %2140 = vmatpush1.msra.mxu0 0.0
    %2141 = vmatprep.subr.mxu0 0.0
    %2142 = vmatpush1.msra.mxu0 0.0
    %2143 = vmatprep.subr.mxu0 0.0
    %2144 = vmatpush1.msra.mxu0 0.0
    %2145 = vmatprep.subr.mxu0 0.0
    %2146 = vmatpush1.msra.mxu0 0.0
    %2147 = vmatprep.subr.mxu0 0.0
    %2148 = vmatpush1.msra.mxu0 0.0
    %2149 = vmatprep.subr.mxu0 0.0
    %2150 = vmatpush1.msra.mxu0 0.0
    %2151 = vmatprep.subr.mxu0 0.0
    %2152 = vmatpush1.msra.mxu0 0.0
    %2153 = vmatprep.subr.mxu0 0.0
    %2154 = vmatpush1.msra.mxu0 0.0
    %2155 = vmatprep.subr.mxu0 0.0
    %2156 = vmatpush1.msra.mxu0 0.0
    %2157 = vmatprep.subr.mxu0 0.0
    %2158 = vmatpush1.msra.mxu0 0.0
    %2159 = vmatprep.subr.mxu0 0.0
    %2160 = vmatpush1.msra.mxu0 0.0
    %2161 = vmatprep.subr.mxu0 0.0
    %2162 = vmatpush1.msra.mxu0 0.0
    %2163 = vmatprep.subr.mxu0 0.0
    %2164 = vmatpush1.msra.mxu0 0.0
    %2165 = vmatprep.subr.mxu0 0.0
    %2166 = vmatpush1.msra.mxu0 0.0
    %2167 = vmatprep.subr.mxu0 0.0
    %2168 = vmatpush1.msra.mxu0 0.0
    %2169 = vmatprep.subr.mxu0 0.0
    %2170 = vmatpush1.msra.mxu0 0.0
    %2171 = vmatprep.subr.mxu0 0.0
    %2172 = vmatpush1.msra.mxu0 0.0
    %2173 = vmatprep.subr.mxu0 0.0
    %2174 = vmatpush1.msra.mxu0 0.0
    %2175 = vmatprep.subr.mxu0 0.0
    %2176 = vmatpush1.msra.mxu0 0.0
    %2177 = vmatprep.subr.mxu0 0.0
    %2178 = vmatpush1.msra.mxu0 0.0
    %2179 = vmatprep.subr.mxu0 0.0
    %2180 = vmatpush1.msra.mxu0 0.0
    %2181 = vmatprep.subr.mxu0 0.0
    %2182 = vmatpush1.msra.mxu0 0.0
    %2183 = vmatprep.subr.mxu0 0.0
    %2184 = vmatpush1.msra.mxu0 0.0
    %2185 = vmatprep.mubr.f32.mxu0 0.0
    %2186 = vmatmul.mubr.f32.gmra.mrb[0].mxu0 %v2119
    %v2187 = vpop.f32.mrb[0].mxu0
    %v2188 = vadd.f32 %v2116, %v2187
    %v2189 = vpop.f32.mrb[0].mxu0
    %2190 = vdwg.mxu0
    %v2191 = vmax.f32 %v2188, 0.0
    %v2192 = vld [vmem:[%s20] sm:$0xff]
    %v2193 = vld [vmem:[%s20 + $0x8] sm:$0xff]
    %v2194 = vld [vmem:[%s20 + $0x10] sm:$0xff]
    %v2195 = vld [vmem:[%s20 + $0x18] sm:$0xff]
    %v2196 = vld [vmem:[%s21] sm:$0x1]
    %v2198 = vlaneseq
    %v2199 = vshrl.u32 %v2198, 7
    %v2200 = vsub.s32 0, %v2199
    %v2201 = vrot.slane %v2196, %v2200
    %v2204 = vsel %vm199, %v2191, 0
    %2206 = vmatprep.subr.mxu0 0.0
    %2207 = vmatpush1.msra.mxu0 %v2192
    %2208 = vmatprep.subr.mxu0 0.0
    %2209 = vmatpush1.msra.mxu0 %v2193
    %2210 = vmatprep.subr.mxu0 0.0
    %2211 = vmatpush1.msra.mxu0 %v2194
    %2212 = vmatprep.subr.mxu0 0.0
    %2213 = vmatpush1.msra.mxu0 %v2195
    %2214 = vmatprep.subr.mxu0 0.0
    %2215 = vmatpush1.msra.mxu0 0.0
    %2216 = vmatprep.subr.mxu0 0.0
    %2217 = vmatpush1.msra.mxu0 0.0
    %2218 = vmatprep.subr.mxu0 0.0
    %2219 = vmatpush1.msra.mxu0 0.0
    %2220 = vmatprep.subr.mxu0 0.0
    %2221 = vmatpush1.msra.mxu0 0.0
    %2222 = vmatprep.subr.mxu0 0.0
    %2223 = vmatpush1.msra.mxu0 0.0
    %2224 = vmatprep.subr.mxu0 0.0
    %2225 = vmatpush1.msra.mxu0 0.0
    %2226 = vmatprep.subr.mxu0 0.0
    %2227 = vmatpush1.msra.mxu0 0.0
    %2228 = vmatprep.subr.mxu0 0.0
    %2229 = vmatpush1.msra.mxu0 0.0
    %2230 = vmatprep.subr.mxu0 0.0
    %2231 = vmatpush1.msra.mxu0 0.0
    %2232 = vmatprep.subr.mxu0 0.0
    %2233 = vmatpush1.msra.mxu0 0.0
    %2234 = vmatprep.subr.mxu0 0.0
    %2235 = vmatpush1.msra.mxu0 0.0
    %2236 = vmatprep.subr.mxu0 0.0
    %2237 = vmatpush1.msra.mxu0 0.0
    %2238 = vmatprep.subr.mxu0 0.0
    %2239 = vmatpush1.msra.mxu0 0.0
    %2240 = vmatprep.subr.mxu0 0.0
    %2241 = vmatpush1.msra.mxu0 0.0
    %2242 = vmatprep.subr.mxu0 0.0
    %2243 = vmatpush1.msra.mxu0 0.0
    %2244 = vmatprep.subr.mxu0 0.0
    %2245 = vmatpush1.msra.mxu0 0.0
    %2246 = vmatprep.subr.mxu0 0.0
    %2247 = vmatpush1.msra.mxu0 0.0
    %2248 = vmatprep.subr.mxu0 0.0
    %2249 = vmatpush1.msra.mxu0 0.0
    %2250 = vmatprep.subr.mxu0 0.0
    %2251 = vmatpush1.msra.mxu0 0.0
    %2252 = vmatprep.subr.mxu0 0.0
    %2253 = vmatpush1.msra.mxu0 0.0
    %2254 = vmatprep.subr.mxu0 0.0
    %2255 = vmatpush1.msra.mxu0 0.0
    %2256 = vmatprep.subr.mxu0 0.0
    %2257 = vmatpush1.msra.mxu0 0.0
    %2258 = vmatprep.subr.mxu0 0.0
    %2259 = vmatpush1.msra.mxu0 0.0
    %2260 = vmatprep.subr.mxu0 0.0
    %2261 = vmatpush1.msra.mxu0 0.0
    %2262 = vmatprep.subr.mxu0 0.0
    %2263 = vmatpush1.msra.mxu0 0.0
    %2264 = vmatprep.subr.mxu0 0.0
    %2265 = vmatpush1.msra.mxu0 0.0
    %2266 = vmatprep.subr.mxu0 0.0
    %2267 = vmatpush1.msra.mxu0 0.0
    %2268 = vmatprep.subr.mxu0 0.0
    %2269 = vmatpush1.msra.mxu0 0.0
    %2270 = vmatprep.mubr.f32.mxu0 0.0
    %2271 = vmatmul.mubr.f32.gmra.mrb[0].mxu0 %v2204
    %v2272 = vpop.f32.mrb[0].mxu0
    %v2273 = vadd.f32 %v2201, %v2272
    %v2274 = vpop.f32.mrb[0].mxu0
    %2275 = vdwg.mxu0
    %v2276 = vmax.f32 %v2273, 0.0
    %v2277 = vld [vmem:[%s22] sm:$0x1]
    %v2278 = vld [vmem:[#allocation2] sm:$0x1]
    %2280 = vset.pattern.permute.xlu0 0
    %2281 = vperm.xlu0 %2280, %v2278
    %v2282 = vpop.permute.xlu0 %2281
    %v2284 = vlaneseq
    %v2285 = vshrl.u32 %v2284, 7
    %v2286 = vsub.s32 0, %v2285
    %v2287 = vrot.slane %v2282, %v2286
    %v2289 = vsel %vm199, %v2277, 0
    %v2292 = vsel %vm199, %v2276, 0
    %2294 = vmatprep.subr.mxu0 0.0
    %2295 = vmatpush1.xpose.msra.mxu0 %v2292
    %2296 = vmatprep.subr.mxu0 0.0
    %2297 = vmatpush1.xpose.msra.mxu0 0.0
    %2298 = vmatprep.subr.mxu0 0.0
    %2299 = vmatpush1.xpose.msra.mxu0 0.0
    %2300 = vmatprep.subr.mxu0 0.0
    %2301 = vmatpush1.xpose.msra.mxu0 0.0
    %2302 = vmatprep.subr.mxu0 0.0
    %2303 = vmatpush1.xpose.msra.mxu0 0.0
    %2304 = vmatprep.subr.mxu0 0.0
    %2305 = vmatpush1.xpose.msra.mxu0 0.0
    %2306 = vmatprep.subr.mxu0 0.0
    %2307 = vmatpush1.xpose.msra.mxu0 0.0
    %2308 = vmatprep.subr.mxu0 0.0
    %2309 = vmatpush1.xpose.msra.mxu0 0.0
    %2310 = vmatprep.subr.mxu0 0.0
    %2311 = vmatpush1.xpose.msra.mxu0 0.0
    %2312 = vmatprep.subr.mxu0 0.0
    %2313 = vmatpush1.xpose.msra.mxu0 0.0
    %2314 = vmatprep.subr.mxu0 0.0
    %2315 = vmatpush1.xpose.msra.mxu0 0.0
    %2316 = vmatprep.subr.mxu0 0.0
    %2317 = vmatpush1.xpose.msra.mxu0 0.0
    %2318 = vmatprep.subr.mxu0 0.0
    %2319 = vmatpush1.xpose.msra.mxu0 0.0
    %2320 = vmatprep.subr.mxu0 0.0
    %2321 = vmatpush1.xpose.msra.mxu0 0.0
    %2322 = vmatprep.subr.mxu0 0.0
    %2323 = vmatpush1.xpose.msra.mxu0 0.0
    %2324 = vmatprep.subr.mxu0 0.0
    %2325 = vmatpush1.xpose.msra.mxu0 0.0
    %2326 = vmatprep.subr.mxu0 0.0
    %2327 = vmatpush1.xpose.msra.mxu0 0.0
    %2328 = vmatprep.subr.mxu0 0.0
    %2329 = vmatpush1.xpose.msra.mxu0 0.0
    %2330 = vmatprep.subr.mxu0 0.0
    %2331 = vmatpush1.xpose.msra.mxu0 0.0
    %2332 = vmatprep.subr.mxu0 0.0
    %2333 = vmatpush1.xpose.msra.mxu0 0.0
    %2334 = vmatprep.subr.mxu0 0.0
    %2335 = vmatpush1.xpose.msra.mxu0 0.0
    %2336 = vmatprep.subr.mxu0 0.0
    %2337 = vmatpush1.xpose.msra.mxu0 0.0
    %2338 = vmatprep.subr.mxu0 0.0
    %2339 = vmatpush1.xpose.msra.mxu0 0.0
    %2340 = vmatprep.subr.mxu0 0.0
    %2341 = vmatpush1.xpose.msra.mxu0 0.0
    %2342 = vmatprep.subr.mxu0 0.0
    %2343 = vmatpush1.xpose.msra.mxu0 0.0
    %2344 = vmatprep.subr.mxu0 0.0
    %2345 = vmatpush1.xpose.msra.mxu0 0.0
    %2346 = vmatprep.subr.mxu0 0.0
    %2347 = vmatpush1.xpose.msra.mxu0 0.0
    %2348 = vmatprep.subr.mxu0 0.0
    %2349 = vmatpush1.xpose.msra.mxu0 0.0
    %2350 = vmatprep.subr.mxu0 0.0
    %2351 = vmatpush1.xpose.msra.mxu0 0.0
    %2352 = vmatprep.subr.mxu0 0.0
    %2353 = vmatpush1.xpose.msra.mxu0 0.0
    %2354 = vmatprep.subr.mxu0 0.0
    %2355 = vmatpush1.xpose.msra.mxu0 0.0
    %2356 = vmatprep.subr.mxu0 0.0
    %2357 = vmatpush1.xpose.msra.mxu0 0.0
    %2358 = vmatprep.mubr.f32.mxu0 0.0
    %2359 = vmatmul.mubr.f32.gmra.mrb[0].mxu0 %v2289
    %v2360 = vpop.f32.mrb[0].mxu0
    %v2361 = vadd.f32 %v2287, %v2360
    %v2362 = vpop.f32.mrb[0].mxu0
    %2363 = vdwg.mxu0
    %vm2364 = vcmask 57344
    %2365 = vst.msk [vmem:[#allocation3] sm:$0x1] %vm2364, %v2361
    // Predicated region
    $region98: #{model_forward.1} parent=1 // pred_check
      _
    $region99: #{model_forward.1} parent=1 // pred_check_branch
      %2367 = sbr.rel (0) target = $region101
    $region100: #{model_forward.1} parent=1 // pred_region
      %s2369 = ssub.s32 16, 16
      %2370 = vsyncadd [#allocation4], %s2369
      %s2372 = sshll.u32 [#allocation3], 4
      %s2373 = int_to_ptr.vmem [resolvable:$true] %s2372
      %2375 = dma.vmem_to_hbm [thread:$0]  %s2373, 16, %s24, [#allocation4]
    $region101: #{model_forward.1} parent=1 // pred_fallthru
      _
    // Predicated region
    $region102: #{model_forward.1} parent=1 // pred_check
      _
    $region103: #{model_forward.1} parent=1 // pred_check_branch
      %2377 = sbr.rel (0) target = $region105
    $region104: #{model_forward.1} parent=1 // pred_region
      %2378 = dma.done [#allocation4], 16
    $region105: #{model_forward.1} parent=1 // pred_fallthru
      _
    %2379 = vsyncpa [#allocation4], 1

</llo_original>
